<compile_context>
chip_gen: v5e
topology: v5e:2x2
jax: 0.10.0
libtpu: 0.0.40
codegen_flags: <defaults>
</compile_context>

<pallas_src>
import functools

import numpy as np
import jax
import jax.numpy as jnp
from jax import lax
from jax.experimental import pallas as pl
from jax.experimental.pallas import tpu as pltpu


# ----------------------------------------------------------------------------
# in-kernel helpers
# ----------------------------------------------------------------------------
def _layer_norm(x, g, b, eps=1e-6):
    mu = jnp.mean(x, axis=-1, keepdims=True)
    xc = x - mu
    var = jnp.mean(xc * xc, axis=-1, keepdims=True)
    return xc * lax.rsqrt(var + eps) * g + b


def _gelu_exact(x):
    # Exact (erf-based) GELU via Abramowitz-Stegun 7.1.26 (|err| < 1.5e-7),
    # built only from exp/div so it is guaranteed to lower in Mosaic.
    z = x * 0.7071067811865476
    a = jnp.abs(z)
    t = 1.0 / (1.0 + 0.3275911 * a)
    poly = t * (0.254829592 + t * (-0.284496736 + t * (1.421413741
             + t * (-1.453152027 + t * 1.061405429))))
    erf_a = 1.0 - poly * jnp.exp(-a * a)
    erf_z = jnp.where(z >= 0, erf_a, -erf_a)
    return 0.5 * x * (1.0 + erf_z)


# ----------------------------------------------------------------------------
# fused ViT-with-prefix forward kernel: grid = (batch_shards, depth)
# ----------------------------------------------------------------------------
def _vit_prefix_kernel(
    tok0_hbm,               # (B*Np, C)  initial tokens, HBM (memory_space=ANY)
    ln1g_ref, ln1b_ref,     # (1, 1, C)
    fqkvw_ref, fqkvb_ref,   # fused [qkv | adapter-down]: (1, C, 3C+mid), (1, 1, 3C+mid)
    aupw_ref, aupb_ref,     # adapter up: (1, mid, 2C), (1, 1, 2C)
    projw_ref, projb_ref,   # proj: (1, C, C), (1, 1, C)
    ln2g_ref, ln2b_ref,     # (1, 1, C)
    fc1w_ref, fc1b_ref,     # (1, C, 4C), (1, 1, 4C)
    fc2w_ref, fc2b_ref,     # (1, 4C, C), (1, 1, C)
    ng_ref, nb_ref,         # final norm: (1, C)
    hw_ref, hb_ref,         # head (padded): (C, ncls_pad), (1, ncls_pad)
    out_ref,                # (1, Bs, ncls_pad)
    tok_ref,                # VMEM scratch (BNs, C): token state across blocks
    dma_sem,                # DMA semaphore for the one-time tok0 copy
    *, batch_per_shard, n_pad, n_real, num_heads, p_scale, attn_scale, embed_dim,
):
    s_id = pl.program_id(0)           # batch shard
    d = pl.program_id(1)              # transformer block
    C = embed_dim
    hd = C // num_heads
    BNs = batch_per_shard * n_pad

    # one-time DMA of this shard's tokens HBM -> resident VMEM scratch
    @pl.when(d == 0)
    def _init():
        cp = pltpu.make_async_copy(
            tok0_hbm.at[pl.ds(s_id * BNs, BNs), :], tok_ref, dma_sem)
        cp.start()
        cp.wait()

    x = tok_ref[...]                                   # (BNs, C) f32

    # block-diagonal batch mask built in-kernel (0 valid / -1e30 masked);
    # only compares & logical ops -> safe VPU lowering, no HBM array.
    row = lax.broadcasted_iota(jnp.int32, (BNs, BNs), 0)
    col = lax.broadcasted_iota(jnp.int32, (BNs, BNs), 1)
    valid = jnp.zeros((BNs, BNs), dtype=jnp.bool_)
    for b in range(batch_per_shard):                   # small static loop
        lo = b * n_pad
        r_in = (row >= lo) & (row < lo + n_pad)
        c_in = (col >= lo) & (col < lo + n_real)
        valid = valid | (r_in & c_in)
    bias = jnp.where(valid, 0.0, -1e30).astype(jnp.float32)

    wdt = fqkvw_ref.dtype                              # bf16 streamed weights

    # ---- LN1 + AdapterAttention + residual ---------------------------------
    h = _layer_norm(x, ln1g_ref[0], ln1b_ref[0])
    h16 = h.astype(wdt)
    fused = (jnp.dot(h16, fqkvw_ref[0], preferred_element_type=jnp.float32)
             + fqkvb_ref[0])                           # (BNs, 3C + mid)
    qkv = fused[:, :3 * C]
    mid = jnp.tanh(fused[:, 3 * C:])                   # adapter bottleneck
    kv_pref = (jnp.dot(mid.astype(wdt), aupw_ref[0],
                       preferred_element_type=jnp.float32) + aupb_ref[0])

    # additive prefix: the q prefix is identically zero in the PyTorch Adapter,
    # so only the k/v columns get p_scale * up(tanh(down(h))) added.
    q = qkv[:, :C] * attn_scale                        # attn scale folded in
    kv = qkv[:, C:] + p_scale * kv_pref
    k = kv[:, :C]
    v = kv[:, C:]

    heads = []
    for hh in range(num_heads):                        # static unroll (small H)
        sl = slice(hh * hd, (hh + 1) * hd)
        qh, kh, vh = q[:, sl], k[:, sl], v[:, sl]
        sc = lax.dot_general(qh, kh, (((1,), (1,)), ((), ())),
                             preferred_element_type=jnp.float32) + bias
        sc = sc - jnp.max(sc, axis=-1, keepdims=True)
        e = jnp.exp(sc)
        p = e * pl.reciprocal(jnp.sum(e, axis=-1, keepdims=True), approx=True)
        heads.append(jnp.dot(p, vh, preferred_element_type=jnp.float32))
    attn_out = jnp.concatenate(heads, axis=-1)         # (BNs, C) head concat
    y = (jnp.dot(attn_out.astype(wdt), projw_ref[0],
                 preferred_element_type=jnp.float32) + projb_ref[0])
    x = x + y                                          # residual 1

    # ---- LN2 + MLP + residual ----------------------------------------------
    h2 = _layer_norm(x, ln2g_ref[0], ln2b_ref[0])
    m = _gelu_exact(jnp.dot(h2.astype(wdt), fc1w_ref[0],
                            preferred_element_type=jnp.float32) + fc1b_ref[0])
    m = (jnp.dot(m.astype(wdt), fc2w_ref[0],
                 preferred_element_type=jnp.float32) + fc2b_ref[0])
    x = x + m                                          # residual 2
    tok_ref[...] = x

    # ---- final norm + classification head (last block only) ----------------
    @pl.when(d == pl.num_programs(1) - 1)
    def _final():
        cls_rows = jnp.concatenate(
            [x[b * n_pad:b * n_pad + 1, :] for b in range(batch_per_shard)],
            axis=0)                                    # (Bs, C)
        t = _layer_norm(cls_rows, ng_ref[...], nb_ref[...])
        logits = (jnp.dot(t, hw_ref[...], preferred_element_type=jnp.float32)
                  + hb_ref[...])                       # (Bs, ncls_pad) lane-dense
        out_ref[...] = logits[None, :, :]


# ----------------------------------------------------------------------------
# wrapper: patch embed / token assembly (XLA prologue) + single fused kernel
# ----------------------------------------------------------------------------
def prefix_forward(params, x_nchw, cfg):
    B, c_in, h_img, w_img = x_nchw.shape
    C = cfg["embed_dim"]
    patch = cfg["patch"]
    num_heads = cfg["num_heads"]
    depth = params["qkv_w"].shape[0]
    ncls = params["head_w"].shape[-1]
    n_shards = cfg.get("batch_shards", 1)
    assert B % n_shards == 0
    Bs = B // n_shards

    # --- patch embedding + cls/pos assembly (layout + one tiny GEMM, in XLA) --
    gh, gw = h_img // patch, w_img // patch
    P = gh * gw
    xp = x_nchw.reshape(B, c_in, gh, patch, gw, patch)
    xp = jnp.transpose(xp, (0, 2, 4, 1, 3, 5)).reshape(B * P, c_in * patch * patch)
    emb = jnp.dot(xp, params["patch_w"]) + params["patch_b"]        # (B*P, C)
    cls = jnp.broadcast_to(params["cls_token"], (B, 1, C))
    tok = jnp.concatenate([cls, emb.reshape(B, P, C)], axis=1) + params["pos_embed"]
    N = P + 1
    n_pad = ((N + 7) // 8) * 8                 # pad tokens to a sublane multiple
    tok = jnp.pad(tok, ((0, 0), (0, n_pad - N), (0, 0))).reshape(B * n_pad, C)
    BNs = Bs * n_pad

    wdt = jnp.bfloat16                         # streamed weight dtype

    # fuse adapter-down into the qkv GEMM: [qkv_w | adown_w] -> (depth, C, 3C+mid)
    fqkv_w = jnp.concatenate([params["qkv_w"], params["adown_w"]], axis=-1).astype(wdt)
    fqkv_b = jnp.concatenate([params["qkv_b"], params["adown_b"]], axis=-1)

    # pad the classifier to 128 lanes for a dense output store
    ncls_pad = ((ncls + 127) // 128) * 128
    head_w = jnp.pad(params["head_w"], ((0, 0), (0, ncls_pad - ncls)))
    head_b = jnp.pad(params["head_b"], ((0, 0), (0, ncls_pad - ncls)))

    stacked = [
        params["ln1_g"], params["ln1_b"],
        fqkv_w, fqkv_b,
        params["aup_w"].astype(wdt), params["aup_b"],
        params["proj_w"].astype(wdt), params["proj_b"],
        params["ln2_g"], params["ln2_b"],
        params["fc1_w"].astype(wdt), params["fc1_b"],
        params["fc2_w"].astype(wdt), params["fc2_b"],
    ]
    tail = [params["norm_g"], params["norm_b"], head_w, head_b]

    perblk = lambda s, d: (d, 0, 0)
    const2 = lambda s, d: (0, 0)

    in_specs = [pl.BlockSpec(memory_space=pl.ANY)]            # tok0 stays in HBM
    in_specs += [pl.BlockSpec((1,) + w.shape[1:], perblk) for w in stacked]
    in_specs += [pl.BlockSpec(w.shape, const2) for w in tail]

    # explicit VMEM budget: double-buffered per-block weights + tail + token
    # scratch + output, plus headroom for intermediates.
    per_block = sum(int(np.prod(w.shape[1:])) * w.dtype.itemsize for w in stacked)
    tail_bytes = sum(int(np.prod(w.shape)) * w.dtype.itemsize for w in tail)
    vmem_limit = int(2 * per_block + tail_bytes + BNs * C * 4
                     + 2 * Bs * ncls_pad * 4 + (16 << 20))
    vmem_limit = min(vmem_limit, 100 << 20)

    kern = functools.partial(
        _vit_prefix_kernel,
        batch_per_shard=Bs, n_pad=n_pad, n_real=N, num_heads=num_heads,
        p_scale=cfg["scale"], attn_scale=(C // num_heads) ** -0.5, embed_dim=C,
    )
    out = pl.pallas_call(
        kern,
        out_shape=jax.ShapeDtypeStruct((n_shards, Bs, ncls_pad), jnp.float32),
        grid=(n_shards, depth),
        in_specs=in_specs,
        out_specs=pl.BlockSpec((1, Bs, ncls_pad), lambda s, d: (s, 0, 0)),
        scratch_shapes=[pltpu.VMEM((BNs, C), jnp.float32),
                        pltpu.SemaphoreType.DMA(())],
        compiler_params=pltpu.CompilerParams(
            dimension_semantics=("parallel", "arbitrary"),   # shards || , depth seq
            vmem_limit_bytes=vmem_limit,
        ),
    )(tok, *stacked, *tail)
    return out.reshape(B, ncls_pad)[:, :ncls]


# ----------------------------------------------------------------------------
# deterministic parameter construction (weights stacked over depth)
# ----------------------------------------------------------------------------
def init_params(key, cfg):
    C, mid, depth = cfg["embed_dim"], cfg["mid_dim"], cfg["depth"]
    patch, in_ch = cfg["patch"], cfg["in_chans"]
    n_cls, n_tok = cfg["num_classes"], cfg["num_tokens"]
    hidden = 4 * C

    def nrm(k, shape, s=0.02):
        return s * jax.random.normal(k, shape, jnp.float32)

    ks = iter(jax.random.split(key, 12))
    return {
        "patch_w": nrm(next(ks), (in_ch * patch * patch, C)),
        "patch_b": jnp.zeros((C,), jnp.float32),
        "cls_token": nrm(next(ks), (1, 1, C)),
        "pos_embed": nrm(next(ks), (1, n_tok, C)),
        "norm_g": jnp.ones((1, C), jnp.float32),
        "norm_b": jnp.zeros((1, C), jnp.float32),
        "head_w": nrm(next(ks), (C, n_cls)),
        "head_b": jnp.zeros((1, n_cls), jnp.float32),
        # per-block, stacked over depth
        "ln1_g": jnp.ones((depth, 1, C), jnp.float32),
        "ln1_b": jnp.zeros((depth, 1, C), jnp.float32),
        "ln2_g": jnp.ones((depth, 1, C), jnp.float32),
        "ln2_b": jnp.zeros((depth, 1, C), jnp.float32),
        "qkv_w": nrm(next(ks), (depth, C, 3 * C)),
        "qkv_b": jnp.zeros((depth, 1, 3 * C), jnp.float32),
        "proj_w": nrm(next(ks), (depth, C, C)),
        "proj_b": jnp.zeros((depth, 1, C), jnp.float32),
        "adown_w": nrm(next(ks), (depth, C, mid)),
        "adown_b": jnp.zeros((depth, 1, mid), jnp.float32),
        "aup_w": nrm(next(ks), (depth, mid, 2 * C)),
        "aup_b": jnp.zeros((depth, 1, 2 * C), jnp.float32),
        "fc1_w": nrm(next(ks), (depth, C, hidden)),
        "fc1_b": jnp.zeros((depth, 1, hidden), jnp.float32),
        "fc2_w": nrm(next(ks), (depth, hidden, C)),
        "fc2_b": jnp.zeros((depth, 1, C), jnp.float32),
    }


# ----------------------------------------------------------------------------
if __name__ == "__main__":
    cfg = dict(
        img=16, patch=4, in_chans=3,
        embed_dim=32, num_heads=4, mid_dim=16,
        depth=2, num_classes=10, scale=0.8,
        batch_shards=2,                       # leading "parallel" grid axis
    )
    cfg["num_tokens"] = (cfg["img"] // cfg["patch"]) ** 2 + 1   # 16 patches + cls

    key = jax.random.PRNGKey(0)
    k_param, k_x = jax.random.split(key)
    params = init_params(k_param, cfg)

    # PyTorch-style NCHW input
    x = jax.random.normal(k_x, (2, cfg["in_chans"], cfg["img"], cfg["img"]), jnp.float32)

    fwd = jax.jit(functools.partial(prefix_forward, cfg=cfg))
    logits = fwd(params, x)
    jax.block_until_ready(logits)
    assert logits.shape == (2, cfg["num_classes"])
    print("KERNEL_OK")
</pallas_src>

<mosaic_0001>
module attributes {stable_mosaic.version = 11 : i64} {
  func.func @_vit_prefix_kernel(%arg0: i32, %arg1: i32, %arg2: memref<48x32xf32, #tpu.memory_space<any>>, %arg3: memref<1x1x32xf32, #tpu.memory_space<vmem>>, %arg4: memref<1x1x32xf32, #tpu.memory_space<vmem>>, %arg5: memref<1x32x112xbf16, #tpu.memory_space<vmem>>, %arg6: memref<1x1x112xf32, #tpu.memory_space<vmem>>, %arg7: memref<1x16x64xbf16, #tpu.memory_space<vmem>>, %arg8: memref<1x1x64xf32, #tpu.memory_space<vmem>>, %arg9: memref<1x32x32xbf16, #tpu.memory_space<vmem>>, %arg10: memref<1x1x32xf32, #tpu.memory_space<vmem>>, %arg11: memref<1x1x32xf32, #tpu.memory_space<vmem>>, %arg12: memref<1x1x32xf32, #tpu.memory_space<vmem>>, %arg13: memref<1x32x128xbf16, #tpu.memory_space<vmem>>, %arg14: memref<1x1x128xf32, #tpu.memory_space<vmem>>, %arg15: memref<1x128x32xbf16, #tpu.memory_space<vmem>>, %arg16: memref<1x1x32xf32, #tpu.memory_space<vmem>>, %arg17: memref<1x32xf32, #tpu.memory_space<vmem>>, %arg18: memref<1x32xf32, #tpu.memory_space<vmem>>, %arg19: memref<32x128xf32, #tpu.memory_space<vmem>>, %arg20: memref<1x128xf32, #tpu.memory_space<vmem>>, %arg21: memref<1x1x128xf32, #tpu.memory_space<vmem>>, %arg22: memref<24x32xf32, #tpu.memory_space<vmem>>, %arg23: memref<!tpu.dma_semaphore, #tpu.memory_space<semaphore_mem>>) attributes {dimension_semantics = [#tpu.dimension_semantics<parallel>, #tpu.dimension_semantics<arbitrary>], iteration_bounds = array<i64: 2, 2>, scalar_prefetch = 0 : i64, scratch_operands = 2 : i64, tpu.core_type = #tpu.core_type<tc>, window_params = [{}, {transform_indices = @transform_1, window_bounds = array<i64: 1, 1, 32>}, {transform_indices = @transform_2, window_bounds = array<i64: 1, 1, 32>}, {transform_indices = @transform_3, window_bounds = array<i64: 1, 32, 112>}, {transform_indices = @transform_4, window_bounds = array<i64: 1, 1, 112>}, {transform_indices = @transform_5, window_bounds = array<i64: 1, 16, 64>}, {transform_indices = @transform_6, window_bounds = array<i64: 1, 1, 64>}, {transform_indices = @transform_7, window_bounds = array<i64: 1, 32, 32>}, {transform_indices = @transform_8, window_bounds = array<i64: 1, 1, 32>}, {transform_indices = @transform_9, window_bounds = array<i64: 1, 1, 32>}, {transform_indices = @transform_10, window_bounds = array<i64: 1, 1, 32>}, {transform_indices = @transform_11, window_bounds = array<i64: 1, 32, 128>}, {transform_indices = @transform_12, window_bounds = array<i64: 1, 1, 128>}, {transform_indices = @transform_13, window_bounds = array<i64: 1, 128, 32>}, {transform_indices = @transform_14, window_bounds = array<i64: 1, 1, 32>}, {pipeline_mode = #tpu.pipeline_mode<synchronous>, transform_indices = @transform_15, window_bounds = array<i64: 1, 32>}, {pipeline_mode = #tpu.pipeline_mode<synchronous>, transform_indices = @transform_16, window_bounds = array<i64: 1, 32>}, {pipeline_mode = #tpu.pipeline_mode<synchronous>, transform_indices = @transform_17, window_bounds = array<i64: 32, 128>}, {pipeline_mode = #tpu.pipeline_mode<synchronous>, transform_indices = @transform_18, window_bounds = array<i64: 1, 128>}, {transform_indices = @transform_19, window_bounds = array<i64: 1, 1, 128>}]} {
    %c0_i32 = arith.constant 0 : i32
    %0 = arith.cmpi eq, %arg1, %c0_i32 : i32
    %1 = arith.extui %0 : i1 to i32
    %c0_i32_0 = arith.constant 0 : i32
    %2 = arith.cmpi ne, %1, %c0_i32_0 : i32
    scf.if %2 {
      %c24_i32_98 = arith.constant 24 : i32
      %233 = arith.muli %arg0, %c24_i32_98 : i32
      %c0_i32_99 = arith.constant 0 : i32
      %234 = tpu.memref_slice %arg2[%233, %c0_i32_99] : memref<48x32xf32, #tpu.memory_space<any>> -> memref<24x32xf32, #tpu.memory_space<any>>
      tpu.enqueue_dma source(%234 : memref<24x32xf32, #tpu.memory_space<any>>) target(%arg22 : memref<24x32xf32, #tpu.memory_space<vmem>>) target_semaphore(%arg23 : memref<!tpu.dma_semaphore, #tpu.memory_space<semaphore_mem>>)
      %c0_i32_100 = arith.constant 0 : i32
      %235 = tpu.memref_slice %arg2[%233, %c0_i32_100] : memref<48x32xf32, #tpu.memory_space<any>> -> memref<24x32xf32, #tpu.memory_space<any>>
      tpu.wait_dma2 semaphore(%arg23 : memref<!tpu.dma_semaphore, #tpu.memory_space<semaphore_mem>>) src(%235 : memref<24x32xf32, #tpu.memory_space<any>>) dst(%arg22 : memref<24x32xf32, #tpu.memory_space<vmem>>)
    } else {
    }
    %c0 = arith.constant 0 : index
    %c0_1 = arith.constant 0 : index
    %3 = vector.load %arg22[%c0, %c0_1] : memref<24x32xf32, #tpu.memory_space<vmem>>, vector<24x32xf32>
    %4 = tpu.iota {dimensions = array<i32: 0>} : vector<24x24xi32>
    %5 = tpu.iota {dimensions = array<i32: 1>} : vector<24x24xi32>
    %false = arith.constant false
    %6 = vector.broadcast %false : i1 to vector<24x24xi1>
    %c0_i32_2 = arith.constant 0 : i32
    %7 = vector.broadcast %c0_i32_2 : i32 to vector<24x24xi32>
    %8 = arith.cmpi sge, %4, %7 : vector<24x24xi32>
    %c24_i32 = arith.constant 24 : i32
    %9 = vector.broadcast %c24_i32 : i32 to vector<24x24xi32>
    %10 = arith.cmpi slt, %4, %9 : vector<24x24xi32>
    %11 = arith.andi %8, %10 : vector<24x24xi1>
    %c0_i32_3 = arith.constant 0 : i32
    %12 = vector.broadcast %c0_i32_3 : i32 to vector<24x24xi32>
    %13 = arith.cmpi sge, %5, %12 : vector<24x24xi32>
    %c17_i32 = arith.constant 17 : i32
    %14 = vector.broadcast %c17_i32 : i32 to vector<24x24xi32>
    %15 = arith.cmpi slt, %5, %14 : vector<24x24xi32>
    %16 = arith.andi %13, %15 : vector<24x24xi1>
    %17 = arith.andi %11, %16 : vector<24x24xi1>
    %18 = arith.ori %6, %17 : vector<24x24xi1>
    %cst = arith.constant 0.000000e+00 : f32
    %cst_4 = arith.constant -1.000000e+30 : f32
    %19 = vector.broadcast %cst : f32 to vector<24x24xf32>
    %20 = vector.broadcast %cst_4 : f32 to vector<24x24xf32>
    %21 = arith.select %18, %19, %20 : vector<24x24xi1>, vector<24x24xf32>
    %c0_5 = arith.constant 0 : index
    %c0_6 = arith.constant 0 : index
    %c0_7 = arith.constant 0 : index
    %22 = vector.load %arg3[%c0_5, %c0_6, %c0_7] : memref<1x1x32xf32, #tpu.memory_space<vmem>>, vector<1x1x32xf32>
    %23 = vector.shape_cast %22 : vector<1x1x32xf32> to vector<1x32xf32>
    %c0_8 = arith.constant 0 : index
    %c0_9 = arith.constant 0 : index
    %c0_10 = arith.constant 0 : index
    %24 = vector.load %arg4[%c0_8, %c0_9, %c0_10] : memref<1x1x32xf32, #tpu.memory_space<vmem>>, vector<1x1x32xf32>
    %25 = vector.shape_cast %24 : vector<1x1x32xf32> to vector<1x32xf32>
    %cst_11 = arith.constant dense<0.000000e+00> : vector<24xf32>
    %26 = vector.multi_reduction <add>, %3, %cst_11 [1] : vector<24x32xf32> to vector<24xf32>
    %27 = vector.shape_cast %26 : vector<24xf32> to vector<24x1xf32>
    %cst_12 = arith.constant 3.200000e+01 : f32
    %28 = vector.broadcast %cst_12 : f32 to vector<24x1xf32>
    %29 = arith.divf %27, %28 : vector<24x1xf32>
    %30 = vector.broadcast %29 : vector<24x1xf32> to vector<24x32xf32>
    %31 = arith.subf %3, %30 : vector<24x32xf32>
    %32 = arith.mulf %31, %31 : vector<24x32xf32>
    %cst_13 = arith.constant dense<0.000000e+00> : vector<24xf32>
    %33 = vector.multi_reduction <add>, %32, %cst_13 [1] : vector<24x32xf32> to vector<24xf32>
    %34 = vector.shape_cast %33 : vector<24xf32> to vector<24x1xf32>
    %cst_14 = arith.constant 3.200000e+01 : f32
    %35 = vector.broadcast %cst_14 : f32 to vector<24x1xf32>
    %36 = arith.divf %34, %35 : vector<24x1xf32>
    %cst_15 = arith.constant 9.99999997E-7 : f32
    %37 = vector.broadcast %cst_15 : f32 to vector<24x1xf32>
    %38 = arith.addf %36, %37 : vector<24x1xf32>
    %39 = math.rsqrt %38 : vector<24x1xf32>
    %40 = vector.broadcast %39 : vector<24x1xf32> to vector<24x32xf32>
    %41 = arith.mulf %31, %40 : vector<24x32xf32>
    %42 = vector.broadcast %23 : vector<1x32xf32> to vector<24x32xf32>
    %43 = arith.mulf %41, %42 : vector<24x32xf32>
    %44 = vector.broadcast %25 : vector<1x32xf32> to vector<24x32xf32>
    %45 = arith.addf %43, %44 : vector<24x32xf32>
    %46 = arith.truncf %45 : vector<24x32xf32> to vector<24x32xbf16>
    %c0_16 = arith.constant 0 : index
    %c0_17 = arith.constant 0 : index
    %c0_18 = arith.constant 0 : index
    %47 = vector.load %arg5[%c0_16, %c0_17, %c0_18] : memref<1x32x112xbf16, #tpu.memory_space<vmem>>, vector<1x32x112xbf16>
    %48 = vector.shape_cast %47 : vector<1x32x112xbf16> to vector<32x112xbf16>
    %cst_19 = arith.constant dense<0.000000e+00> : vector<24x112xf32>
    %49 = tpu.matmul %46, %48, %cst_19 {dimension_numbers = #tpu.dot_dimension_numbers<[1], [0], [0], [1], [0, 0, 1, 1], [], []>} : vector<24x32xbf16>, vector<32x112xbf16>, vector<24x112xf32> -> vector<24x112xf32>
    %c0_20 = arith.constant 0 : index
    %c0_21 = arith.constant 0 : index
    %c0_22 = arith.constant 0 : index
    %50 = vector.load %arg6[%c0_20, %c0_21, %c0_22] : memref<1x1x112xf32, #tpu.memory_space<vmem>>, vector<1x1x112xf32>
    %51 = vector.shape_cast %50 : vector<1x1x112xf32> to vector<1x112xf32>
    %52 = vector.broadcast %51 : vector<1x112xf32> to vector<24x112xf32>
    %53 = arith.addf %49, %52 : vector<24x112xf32>
    %54 = vector.extract_strided_slice %53 {offsets = [0, 0], sizes = [24, 96], strides = [1, 1]} : vector<24x112xf32> to vector<24x96xf32>
    %55 = vector.extract_strided_slice %53 {offsets = [0, 96], sizes = [24, 16], strides = [1, 1]} : vector<24x112xf32> to vector<24x16xf32>
    %56 = math.tanh %55 : vector<24x16xf32>
    %57 = arith.truncf %56 : vector<24x16xf32> to vector<24x16xbf16>
    %c0_23 = arith.constant 0 : index
    %c0_24 = arith.constant 0 : index
    %c0_25 = arith.constant 0 : index
    %58 = vector.load %arg7[%c0_23, %c0_24, %c0_25] : memref<1x16x64xbf16, #tpu.memory_space<vmem>>, vector<1x16x64xbf16>
    %59 = vector.shape_cast %58 : vector<1x16x64xbf16> to vector<16x64xbf16>
    %cst_26 = arith.constant dense<0.000000e+00> : vector<24x64xf32>
    %60 = tpu.matmul %57, %59, %cst_26 {dimension_numbers = #tpu.dot_dimension_numbers<[1], [0], [0], [1], [0, 0, 1, 1], [], []>} : vector<24x16xbf16>, vector<16x64xbf16>, vector<24x64xf32> -> vector<24x64xf32>
    %c0_27 = arith.constant 0 : index
    %c0_28 = arith.constant 0 : index
    %c0_29 = arith.constant 0 : index
    %61 = vector.load %arg8[%c0_27, %c0_28, %c0_29] : memref<1x1x64xf32, #tpu.memory_space<vmem>>, vector<1x1x64xf32>
    %62 = vector.shape_cast %61 : vector<1x1x64xf32> to vector<1x64xf32>
    %63 = vector.broadcast %62 : vector<1x64xf32> to vector<24x64xf32>
    %64 = arith.addf %60, %63 : vector<24x64xf32>
    %65 = vector.extract_strided_slice %54 {offsets = [0, 0], sizes = [24, 32], strides = [1, 1]} : vector<24x96xf32> to vector<24x32xf32>
    %cst_30 = arith.constant 0.353553385 : f32
    %66 = vector.broadcast %cst_30 : f32 to vector<24x32xf32>
    %67 = arith.mulf %65, %66 : vector<24x32xf32>
    %68 = vector.extract_strided_slice %54 {offsets = [0, 32], sizes = [24, 64], strides = [1, 1]} : vector<24x96xf32> to vector<24x64xf32>
    %cst_31 = arith.constant 8.000000e-01 : f32
    %69 = vector.broadcast %cst_31 : f32 to vector<24x64xf32>
    %70 = arith.mulf %69, %64 : vector<24x64xf32>
    %71 = arith.addf %68, %70 : vector<24x64xf32>
    %72 = vector.extract_strided_slice %71 {offsets = [0, 0], sizes = [24, 32], strides = [1, 1]} : vector<24x64xf32> to vector<24x32xf32>
    %73 = vector.extract_strided_slice %71 {offsets = [0, 32], sizes = [24, 32], strides = [1, 1]} : vector<24x64xf32> to vector<24x32xf32>
    %74 = vector.extract_strided_slice %67 {offsets = [0, 0], sizes = [24, 8], strides = [1, 1]} : vector<24x32xf32> to vector<24x8xf32>
    %75 = vector.extract_strided_slice %72 {offsets = [0, 0], sizes = [24, 8], strides = [1, 1]} : vector<24x32xf32> to vector<24x8xf32>
    %76 = vector.extract_strided_slice %73 {offsets = [0, 0], sizes = [24, 8], strides = [1, 1]} : vector<24x32xf32> to vector<24x8xf32>
    %cst_32 = arith.constant dense<0.000000e+00> : vector<24x24xf32>
    %77 = tpu.matmul %74, %75, %cst_32 {dimension_numbers = #tpu.dot_dimension_numbers<[1], [1], [0], [0], [0, 0, 1, 0], [], []>} : vector<24x8xf32>, vector<24x8xf32>, vector<24x24xf32> -> vector<24x24xf32>
    %78 = arith.addf %77, %21 : vector<24x24xf32>
    %cst_33 = arith.constant dense<0xFF800000> : vector<24xf32>
    %79 = vector.multi_reduction <maximumf>, %78, %cst_33 [1] : vector<24x24xf32> to vector<24xf32>
    %80 = vector.shape_cast %79 : vector<24xf32> to vector<24x1xf32>
    %81 = vector.broadcast %80 : vector<24x1xf32> to vector<24x24xf32>
    %82 = arith.subf %78, %81 : vector<24x24xf32>
    %83 = math.exp %82 : vector<24x24xf32>
    %cst_34 = arith.constant dense<0.000000e+00> : vector<24xf32>
    %84 = vector.multi_reduction <add>, %83, %cst_34 [1] : vector<24x24xf32> to vector<24xf32>
    %85 = vector.shape_cast %84 : vector<24xf32> to vector<24x1xf32>
    %86 = tpu.reciprocal %85 {approx = true} : vector<24x1xf32> -> vector<24x1xf32>
    %87 = vector.broadcast %86 : vector<24x1xf32> to vector<24x24xf32>
    %88 = arith.mulf %83, %87 : vector<24x24xf32>
    %cst_35 = arith.constant dense<0.000000e+00> : vector<24x8xf32>
    %89 = tpu.matmul %88, %76, %cst_35 {dimension_numbers = #tpu.dot_dimension_numbers<[1], [0], [0], [1], [0, 0, 1, 1], [], []>} : vector<24x24xf32>, vector<24x8xf32>, vector<24x8xf32> -> vector<24x8xf32>
    %90 = vector.extract_strided_slice %67 {offsets = [0, 8], sizes = [24, 8], strides = [1, 1]} : vector<24x32xf32> to vector<24x8xf32>
    %91 = vector.extract_strided_slice %72 {offsets = [0, 8], sizes = [24, 8], strides = [1, 1]} : vector<24x32xf32> to vector<24x8xf32>
    %92 = vector.extract_strided_slice %73 {offsets = [0, 8], sizes = [24, 8], strides = [1, 1]} : vector<24x32xf32> to vector<24x8xf32>
    %cst_36 = arith.constant dense<0.000000e+00> : vector<24x24xf32>
    %93 = tpu.matmul %90, %91, %cst_36 {dimension_numbers = #tpu.dot_dimension_numbers<[1], [1], [0], [0], [0, 0, 1, 0], [], []>} : vector<24x8xf32>, vector<24x8xf32>, vector<24x24xf32> -> vector<24x24xf32>
    %94 = arith.addf %93, %21 : vector<24x24xf32>
    %cst_37 = arith.constant dense<0xFF800000> : vector<24xf32>
    %95 = vector.multi_reduction <maximumf>, %94, %cst_37 [1] : vector<24x24xf32> to vector<24xf32>
    %96 = vector.shape_cast %95 : vector<24xf32> to vector<24x1xf32>
    %97 = vector.broadcast %96 : vector<24x1xf32> to vector<24x24xf32>
    %98 = arith.subf %94, %97 : vector<24x24xf32>
    %99 = math.exp %98 : vector<24x24xf32>
    %cst_38 = arith.constant dense<0.000000e+00> : vector<24xf32>
    %100 = vector.multi_reduction <add>, %99, %cst_38 [1] : vector<24x24xf32> to vector<24xf32>
    %101 = vector.shape_cast %100 : vector<24xf32> to vector<24x1xf32>
    %102 = tpu.reciprocal %101 {approx = true} : vector<24x1xf32> -> vector<24x1xf32>
    %103 = vector.broadcast %102 : vector<24x1xf32> to vector<24x24xf32>
    %104 = arith.mulf %99, %103 : vector<24x24xf32>
    %cst_39 = arith.constant dense<0.000000e+00> : vector<24x8xf32>
    %105 = tpu.matmul %104, %92, %cst_39 {dimension_numbers = #tpu.dot_dimension_numbers<[1], [0], [0], [1], [0, 0, 1, 1], [], []>} : vector<24x24xf32>, vector<24x8xf32>, vector<24x8xf32> -> vector<24x8xf32>
    %106 = vector.extract_strided_slice %67 {offsets = [0, 16], sizes = [24, 8], strides = [1, 1]} : vector<24x32xf32> to vector<24x8xf32>
    %107 = vector.extract_strided_slice %72 {offsets = [0, 16], sizes = [24, 8], strides = [1, 1]} : vector<24x32xf32> to vector<24x8xf32>
    %108 = vector.extract_strided_slice %73 {offsets = [0, 16], sizes = [24, 8], strides = [1, 1]} : vector<24x32xf32> to vector<24x8xf32>
    %cst_40 = arith.constant dense<0.000000e+00> : vector<24x24xf32>
    %109 = tpu.matmul %106, %107, %cst_40 {dimension_numbers = #tpu.dot_dimension_numbers<[1], [1], [0], [0], [0, 0, 1, 0], [], []>} : vector<24x8xf32>, vector<24x8xf32>, vector<24x24xf32> -> vector<24x24xf32>
    %110 = arith.addf %109, %21 : vector<24x24xf32>
    %cst_41 = arith.constant dense<0xFF800000> : vector<24xf32>
    %111 = vector.multi_reduction <maximumf>, %110, %cst_41 [1] : vector<24x24xf32> to vector<24xf32>
    %112 = vector.shape_cast %111 : vector<24xf32> to vector<24x1xf32>
    %113 = vector.broadcast %112 : vector<24x1xf32> to vector<24x24xf32>
    %114 = arith.subf %110, %113 : vector<24x24xf32>
    %115 = math.exp %114 : vector<24x24xf32>
    %cst_42 = arith.constant dense<0.000000e+00> : vector<24xf32>
    %116 = vector.multi_reduction <add>, %115, %cst_42 [1] : vector<24x24xf32> to vector<24xf32>
    %117 = vector.shape_cast %116 : vector<24xf32> to vector<24x1xf32>
    %118 = tpu.reciprocal %117 {approx = true} : vector<24x1xf32> -> vector<24x1xf32>
    %119 = vector.broadcast %118 : vector<24x1xf32> to vector<24x24xf32>
    %120 = arith.mulf %115, %119 : vector<24x24xf32>
    %cst_43 = arith.constant dense<0.000000e+00> : vector<24x8xf32>
    %121 = tpu.matmul %120, %108, %cst_43 {dimension_numbers = #tpu.dot_dimension_numbers<[1], [0], [0], [1], [0, 0, 1, 1], [], []>} : vector<24x24xf32>, vector<24x8xf32>, vector<24x8xf32> -> vector<24x8xf32>
    %122 = vector.extract_strided_slice %67 {offsets = [0, 24], sizes = [24, 8], strides = [1, 1]} : vector<24x32xf32> to vector<24x8xf32>
    %123 = vector.extract_strided_slice %72 {offsets = [0, 24], sizes = [24, 8], strides = [1, 1]} : vector<24x32xf32> to vector<24x8xf32>
    %124 = vector.extract_strided_slice %73 {offsets = [0, 24], sizes = [24, 8], strides = [1, 1]} : vector<24x32xf32> to vector<24x8xf32>
    %cst_44 = arith.constant dense<0.000000e+00> : vector<24x24xf32>
    %125 = tpu.matmul %122, %123, %cst_44 {dimension_numbers = #tpu.dot_dimension_numbers<[1], [1], [0], [0], [0, 0, 1, 0], [], []>} : vector<24x8xf32>, vector<24x8xf32>, vector<24x24xf32> -> vector<24x24xf32>
    %126 = arith.addf %125, %21 : vector<24x24xf32>
    %cst_45 = arith.constant dense<0xFF800000> : vector<24xf32>
    %127 = vector.multi_reduction <maximumf>, %126, %cst_45 [1] : vector<24x24xf32> to vector<24xf32>
    %128 = vector.shape_cast %127 : vector<24xf32> to vector<24x1xf32>
    %129 = vector.broadcast %128 : vector<24x1xf32> to vector<24x24xf32>
    %130 = arith.subf %126, %129 : vector<24x24xf32>
    %131 = math.exp %130 : vector<24x24xf32>
    %cst_46 = arith.constant dense<0.000000e+00> : vector<24xf32>
    %132 = vector.multi_reduction <add>, %131, %cst_46 [1] : vector<24x24xf32> to vector<24xf32>
    %133 = vector.shape_cast %132 : vector<24xf32> to vector<24x1xf32>
    %134 = tpu.reciprocal %133 {approx = true} : vector<24x1xf32> -> vector<24x1xf32>
    %135 = vector.broadcast %134 : vector<24x1xf32> to vector<24x24xf32>
    %136 = arith.mulf %131, %135 : vector<24x24xf32>
    %cst_47 = arith.constant dense<0.000000e+00> : vector<24x8xf32>
    %137 = tpu.matmul %136, %124, %cst_47 {dimension_numbers = #tpu.dot_dimension_numbers<[1], [0], [0], [1], [0, 0, 1, 1], [], []>} : vector<24x24xf32>, vector<24x8xf32>, vector<24x8xf32> -> vector<24x8xf32>
    %138 = tpu.concatenate %89, %105, %121, %137 in 1 : vector<24x8xf32>, vector<24x8xf32>, vector<24x8xf32>, vector<24x8xf32> -> vector<24x32xf32>
    %139 = arith.truncf %138 : vector<24x32xf32> to vector<24x32xbf16>
    %c0_48 = arith.constant 0 : index
    %c0_49 = arith.constant 0 : index
    %c0_50 = arith.constant 0 : index
    %140 = vector.load %arg9[%c0_48, %c0_49, %c0_50] : memref<1x32x32xbf16, #tpu.memory_space<vmem>>, vector<1x32x32xbf16>
    %141 = vector.shape_cast %140 : vector<1x32x32xbf16> to vector<32x32xbf16>
    %cst_51 = arith.constant dense<0.000000e+00> : vector<24x32xf32>
    %142 = tpu.matmul %139, %141, %cst_51 {dimension_numbers = #tpu.dot_dimension_numbers<[1], [0], [0], [1], [0, 0, 1, 1], [], []>} : vector<24x32xbf16>, vector<32x32xbf16>, vector<24x32xf32> -> vector<24x32xf32>
    %c0_52 = arith.constant 0 : index
    %c0_53 = arith.constant 0 : index
    %c0_54 = arith.constant 0 : index
    %143 = vector.load %arg10[%c0_52, %c0_53, %c0_54] : memref<1x1x32xf32, #tpu.memory_space<vmem>>, vector<1x1x32xf32>
    %144 = vector.shape_cast %143 : vector<1x1x32xf32> to vector<1x32xf32>
    %145 = vector.broadcast %144 : vector<1x32xf32> to vector<24x32xf32>
    %146 = arith.addf %142, %145 : vector<24x32xf32>
    %147 = arith.addf %3, %146 : vector<24x32xf32>
    %c0_55 = arith.constant 0 : index
    %c0_56 = arith.constant 0 : index
    %c0_57 = arith.constant 0 : index
    %148 = vector.load %arg11[%c0_55, %c0_56, %c0_57] : memref<1x1x32xf32, #tpu.memory_space<vmem>>, vector<1x1x32xf32>
    %149 = vector.shape_cast %148 : vector<1x1x32xf32> to vector<1x32xf32>
    %c0_58 = arith.constant 0 : index
    %c0_59 = arith.constant 0 : index
    %c0_60 = arith.constant 0 : index
    %150 = vector.load %arg12[%c0_58, %c0_59, %c0_60] : memref<1x1x32xf32, #tpu.memory_space<vmem>>, vector<1x1x32xf32>
    %151 = vector.shape_cast %150 : vector<1x1x32xf32> to vector<1x32xf32>
    %cst_61 = arith.constant dense<0.000000e+00> : vector<24xf32>
    %152 = vector.multi_reduction <add>, %147, %cst_61 [1] : vector<24x32xf32> to vector<24xf32>
    %153 = vector.shape_cast %152 : vector<24xf32> to vector<24x1xf32>
    %cst_62 = arith.constant 3.200000e+01 : f32
    %154 = vector.broadcast %cst_62 : f32 to vector<24x1xf32>
    %155 = arith.divf %153, %154 : vector<24x1xf32>
    %156 = vector.broadcast %155 : vector<24x1xf32> to vector<24x32xf32>
    %157 = arith.subf %147, %156 : vector<24x32xf32>
    %158 = arith.mulf %157, %157 : vector<24x32xf32>
    %cst_63 = arith.constant dense<0.000000e+00> : vector<24xf32>
    %159 = vector.multi_reduction <add>, %158, %cst_63 [1] : vector<24x32xf32> to vector<24xf32>
    %160 = vector.shape_cast %159 : vector<24xf32> to vector<24x1xf32>
    %cst_64 = arith.constant 3.200000e+01 : f32
    %161 = vector.broadcast %cst_64 : f32 to vector<24x1xf32>
    %162 = arith.divf %160, %161 : vector<24x1xf32>
    %cst_65 = arith.constant 9.99999997E-7 : f32
    %163 = vector.broadcast %cst_65 : f32 to vector<24x1xf32>
    %164 = arith.addf %162, %163 : vector<24x1xf32>
    %165 = math.rsqrt %164 : vector<24x1xf32>
    %166 = vector.broadcast %165 : vector<24x1xf32> to vector<24x32xf32>
    %167 = arith.mulf %157, %166 : vector<24x32xf32>
    %168 = vector.broadcast %149 : vector<1x32xf32> to vector<24x32xf32>
    %169 = arith.mulf %167, %168 : vector<24x32xf32>
    %170 = vector.broadcast %151 : vector<1x32xf32> to vector<24x32xf32>
    %171 = arith.addf %169, %170 : vector<24x32xf32>
    %172 = arith.truncf %171 : vector<24x32xf32> to vector<24x32xbf16>
    %c0_66 = arith.constant 0 : index
    %c0_67 = arith.constant 0 : index
    %c0_68 = arith.constant 0 : index
    %173 = vector.load %arg13[%c0_66, %c0_67, %c0_68] : memref<1x32x128xbf16, #tpu.memory_space<vmem>>, vector<1x32x128xbf16>
    %174 = vector.shape_cast %173 : vector<1x32x128xbf16> to vector<32x128xbf16>
    %cst_69 = arith.constant dense<0.000000e+00> : vector<24x128xf32>
    %175 = tpu.matmul %172, %174, %cst_69 {dimension_numbers = #tpu.dot_dimension_numbers<[1], [0], [0], [1], [0, 0, 1, 1], [], []>} : vector<24x32xbf16>, vector<32x128xbf16>, vector<24x128xf32> -> vector<24x128xf32>
    %c0_70 = arith.constant 0 : index
    %c0_71 = arith.constant 0 : index
    %c0_72 = arith.constant 0 : index
    %176 = vector.load %arg14[%c0_70, %c0_71, %c0_72] : memref<1x1x128xf32, #tpu.memory_space<vmem>>, vector<1x1x128xf32>
    %177 = vector.shape_cast %176 : vector<1x1x128xf32> to vector<1x128xf32>
    %178 = vector.broadcast %177 : vector<1x128xf32> to vector<24x128xf32>
    %179 = arith.addf %175, %178 : vector<24x128xf32>
    %cst_73 = arith.constant 0.707106769 : f32
    %180 = vector.broadcast %cst_73 : f32 to vector<24x128xf32>
    %181 = arith.mulf %179, %180 : vector<24x128xf32>
    %182 = math.absf %181 : vector<24x128xf32>
    %cst_74 = arith.constant 0.327591091 : f32
    %183 = vector.broadcast %cst_74 : f32 to vector<24x128xf32>
    %184 = arith.mulf %183, %182 : vector<24x128xf32>
    %cst_75 = arith.constant 1.000000e+00 : f32
    %185 = vector.broadcast %cst_75 : f32 to vector<24x128xf32>
    %186 = arith.addf %185, %184 : vector<24x128xf32>
    %cst_76 = arith.constant 1.000000e+00 : f32
    %187 = vector.broadcast %cst_76 : f32 to vector<24x128xf32>
    %188 = arith.divf %187, %186 : vector<24x128xf32>
    %cst_77 = arith.constant 1.06140542 : f32
    %189 = vector.broadcast %cst_77 : f32 to vector<24x128xf32>
    %190 = arith.mulf %188, %189 : vector<24x128xf32>
    %cst_78 = arith.constant -1.45315206 : f32
    %191 = vector.broadcast %cst_78 : f32 to vector<24x128xf32>
    %192 = arith.addf %191, %190 : vector<24x128xf32>
    %193 = arith.mulf %188, %192 : vector<24x128xf32>
    %cst_79 = arith.constant 1.42141378 : f32
    %194 = vector.broadcast %cst_79 : f32 to vector<24x128xf32>
    %195 = arith.addf %194, %193 : vector<24x128xf32>
    %196 = arith.mulf %188, %195 : vector<24x128xf32>
    %cst_80 = arith.constant -0.284496725 : f32
    %197 = vector.broadcast %cst_80 : f32 to vector<24x128xf32>
    %198 = arith.addf %197, %196 : vector<24x128xf32>
    %199 = arith.mulf %188, %198 : vector<24x128xf32>
    %cst_81 = arith.constant 0.254829586 : f32
    %200 = vector.broadcast %cst_81 : f32 to vector<24x128xf32>
    %201 = arith.addf %200, %199 : vector<24x128xf32>
    %202 = arith.mulf %188, %201 : vector<24x128xf32>
    %cst_82 = arith.constant 0.000000e+00 : f32
    %203 = vector.broadcast %cst_82 : f32 to vector<24x128xf32>
    %204 = arith.subf %203, %182 : vector<24x128xf32>
    %205 = arith.mulf %204, %182 : vector<24x128xf32>
    %206 = math.exp %205 : vector<24x128xf32>
    %207 = arith.mulf %202, %206 : vector<24x128xf32>
    %cst_83 = arith.constant 1.000000e+00 : f32
    %208 = vector.broadcast %cst_83 : f32 to vector<24x128xf32>
    %209 = arith.subf %208, %207 : vector<24x128xf32>
    %cst_84 = arith.constant 0.000000e+00 : f32
    %210 = vector.broadcast %cst_84 : f32 to vector<24x128xf32>
    %211 = arith.cmpf oge, %181, %210 : vector<24x128xf32>
    %cst_85 = arith.constant 0.000000e+00 : f32
    %212 = vector.broadcast %cst_85 : f32 to vector<24x128xf32>
    %213 = arith.subf %212, %209 : vector<24x128xf32>
    %214 = arith.select %211, %209, %213 : vector<24x128xi1>, vector<24x128xf32>
    %cst_86 = arith.constant 5.000000e-01 : f32
    %215 = vector.broadcast %cst_86 : f32 to vector<24x128xf32>
    %216 = arith.mulf %215, %179 : vector<24x128xf32>
    %cst_87 = arith.constant 1.000000e+00 : f32
    %217 = vector.broadcast %cst_87 : f32 to vector<24x128xf32>
    %218 = arith.addf %217, %214 : vector<24x128xf32>
    %219 = arith.mulf %216, %218 : vector<24x128xf32>
    %220 = arith.truncf %219 : vector<24x128xf32> to vector<24x128xbf16>
    %c0_88 = arith.constant 0 : index
    %c0_89 = arith.constant 0 : index
    %c0_90 = arith.constant 0 : index
    %221 = vector.load %arg15[%c0_88, %c0_89, %c0_90] : memref<1x128x32xbf16, #tpu.memory_space<vmem>>, vector<1x128x32xbf16>
    %222 = vector.shape_cast %221 : vector<1x128x32xbf16> to vector<128x32xbf16>
    %cst_91 = arith.constant dense<0.000000e+00> : vector<24x32xf32>
    %223 = tpu.matmul %220, %222, %cst_91 {dimension_numbers = #tpu.dot_dimension_numbers<[1], [0], [0], [1], [0, 0, 1, 1], [], []>} : vector<24x128xbf16>, vector<128x32xbf16>, vector<24x32xf32> -> vector<24x32xf32>
    %c0_92 = arith.constant 0 : index
    %c0_93 = arith.constant 0 : index
    %c0_94 = arith.constant 0 : index
    %224 = vector.load %arg16[%c0_92, %c0_93, %c0_94] : memref<1x1x32xf32, #tpu.memory_space<vmem>>, vector<1x1x32xf32>
    %225 = vector.shape_cast %224 : vector<1x1x32xf32> to vector<1x32xf32>
    %226 = vector.broadcast %225 : vector<1x32xf32> to vector<24x32xf32>
    %227 = arith.addf %223, %226 : vector<24x32xf32>
    %228 = arith.addf %147, %227 : vector<24x32xf32>
    %c0_95 = arith.constant 0 : index
    %c0_96 = arith.constant 0 : index
    %229 = vector.load %arg22[%c0_95, %c0_96] : memref<24x32xf32, #tpu.memory_space<vmem>>, vector<24x32xf32>
    tpu.vector_store %arg22[%c0_95, %c0_96], %228 {strides = array<i32>} : memref<24x32xf32, #tpu.memory_space<vmem>>, vector<24x32xf32>,
    %c1_i32 = arith.constant 1 : i32
    %230 = arith.cmpi eq, %arg1, %c1_i32 : i32
    %231 = arith.extui %230 : i1 to i32
    %c0_i32_97 = arith.constant 0 : i32
    %232 = arith.cmpi ne, %231, %c0_i32_97 : i32
    scf.if %232 {
      %233 = vector.extract_strided_slice %228 {offsets = [0, 0], sizes = [1, 32], strides = [1, 1]} : vector<24x32xf32> to vector<1x32xf32>
      %c0_98 = arith.constant 0 : index
      %c0_99 = arith.constant 0 : index
      %234 = vector.load %arg17[%c0_98, %c0_99] : memref<1x32xf32, #tpu.memory_space<vmem>>, vector<1x32xf32>
      %c0_100 = arith.constant 0 : index
      %c0_101 = arith.constant 0 : index
      %235 = vector.load %arg18[%c0_100, %c0_101] : memref<1x32xf32, #tpu.memory_space<vmem>>, vector<1x32xf32>
      %cst_102 = arith.constant dense<0.000000e+00> : vector<1xf32>
      %236 = vector.multi_reduction <add>, %233, %cst_102 [1] : vector<1x32xf32> to vector<1xf32>
      %237 = vector.shape_cast %236 : vector<1xf32> to vector<1x1xf32>
      %cst_103 = arith.constant 3.200000e+01 : f32
      %238 = vector.broadcast %cst_103 : f32 to vector<1x1xf32>
      %239 = arith.divf %237, %238 : vector<1x1xf32>
      %240 = vector.broadcast %239 : vector<1x1xf32> to vector<1x32xf32>
      %241 = arith.subf %233, %240 : vector<1x32xf32>
      %242 = arith.mulf %241, %241 : vector<1x32xf32>
      %cst_104 = arith.constant dense<0.000000e+00> : vector<1xf32>
      %243 = vector.multi_reduction <add>, %242, %cst_104 [1] : vector<1x32xf32> to vector<1xf32>
      %244 = vector.shape_cast %243 : vector<1xf32> to vector<1x1xf32>
      %cst_105 = arith.constant 3.200000e+01 : f32
      %245 = vector.broadcast %cst_105 : f32 to vector<1x1xf32>
      %246 = arith.divf %244, %245 : vector<1x1xf32>
      %cst_106 = arith.constant 9.99999997E-7 : f32
      %247 = vector.broadcast %cst_106 : f32 to vector<1x1xf32>
      %248 = arith.addf %246, %247 : vector<1x1xf32>
      %249 = math.rsqrt %248 : vector<1x1xf32>
      %250 = vector.broadcast %249 : vector<1x1xf32> to vector<1x32xf32>
      %251 = arith.mulf %241, %250 : vector<1x32xf32>
      %252 = arith.mulf %251, %234 : vector<1x32xf32>
      %253 = arith.addf %252, %235 : vector<1x32xf32>
      %c0_107 = arith.constant 0 : index
      %c0_108 = arith.constant 0 : index
      %254 = vector.load %arg19[%c0_107, %c0_108] : memref<32x128xf32, #tpu.memory_space<vmem>>, vector<32x128xf32>
      %cst_109 = arith.constant dense<0.000000e+00> : vector<1x128xf32>
      %255 = tpu.matmul %253, %254, %cst_109 {dimension_numbers = #tpu.dot_dimension_numbers<[1], [0], [0], [1], [0, 0, 1, 1], [], []>} : vector<1x32xf32>, vector<32x128xf32>, vector<1x128xf32> -> vector<1x128xf32>
      %c0_110 = arith.constant 0 : index
      %c0_111 = arith.constant 0 : index
      %256 = vector.load %arg20[%c0_110, %c0_111] : memref<1x128xf32, #tpu.memory_space<vmem>>, vector<1x128xf32>
      %257 = arith.addf %255, %256 : vector<1x128xf32>
      %258 = vector.shape_cast %257 : vector<1x128xf32> to vector<1x1x128xf32>
      %c0_112 = arith.constant 0 : index
      %c0_113 = arith.constant 0 : index
      %c0_114 = arith.constant 0 : index
      %259 = vector.load %arg21[%c0_112, %c0_113, %c0_114] : memref<1x1x128xf32, #tpu.memory_space<vmem>>, vector<1x1x128xf32>
      tpu.vector_store %arg21[%c0_112, %c0_113, %c0_114], %258 {strides = array<i32>} : memref<1x1x128xf32, #tpu.memory_space<vmem>>, vector<1x1x128xf32>,
    } else {
    }
    return
  }
  func.func @transform_1(%arg0: i32, %arg1: i32) -> (i32, i32, i32) {
    %c0_i32 = arith.constant 0 : i32
    %c0_i32_0 = arith.constant 0 : i32
    %c0_i32_1 = arith.constant 0 : i32
    return %arg1, %c0_i32, %c0_i32_0 : i32, i32, i32
  }
  func.func @transform_2(%arg0: i32, %arg1: i32) -> (i32, i32, i32) {
    %c0_i32 = arith.constant 0 : i32
    %c0_i32_0 = arith.constant 0 : i32
    %c0_i32_1 = arith.constant 0 : i32
    return %arg1, %c0_i32, %c0_i32_0 : i32, i32, i32
  }
  func.func @transform_3(%arg0: i32, %arg1: i32) -> (i32, i32, i32) {
    %c0_i32 = arith.constant 0 : i32
    %c0_i32_0 = arith.constant 0 : i32
    %c0_i32_1 = arith.constant 0 : i32
    return %arg1, %c0_i32, %c0_i32_0 : i32, i32, i32
  }
  func.func @transform_4(%arg0: i32, %arg1: i32) -> (i32, i32, i32) {
    %c0_i32 = arith.constant 0 : i32
    %c0_i32_0 = arith.constant 0 : i32
    %c0_i32_1 = arith.constant 0 : i32
    return %arg1, %c0_i32, %c0_i32_0 : i32, i32, i32
  }
  func.func @transform_5(%arg0: i32, %arg1: i32) -> (i32, i32, i32) {
    %c0_i32 = arith.constant 0 : i32
    %c0_i32_0 = arith.constant 0 : i32
    %c0_i32_1 = arith.constant 0 : i32
    return %arg1, %c0_i32, %c0_i32_0 : i32, i32, i32
  }
  func.func @transform_6(%arg0: i32, %arg1: i32) -> (i32, i32, i32) {
    %c0_i32 = arith.constant 0 : i32
    %c0_i32_0 = arith.constant 0 : i32
    %c0_i32_1 = arith.constant 0 : i32
    return %arg1, %c0_i32, %c0_i32_0 : i32, i32, i32
  }
  func.func @transform_7(%arg0: i32, %arg1: i32) -> (i32, i32, i32) {
    %c0_i32 = arith.constant 0 : i32
    %c0_i32_0 = arith.constant 0 : i32
    %c0_i32_1 = arith.constant 0 : i32
    return %arg1, %c0_i32, %c0_i32_0 : i32, i32, i32
  }
  func.func @transform_8(%arg0: i32, %arg1: i32) -> (i32, i32, i32) {
    %c0_i32 = arith.constant 0 : i32
    %c0_i32_0 = arith.constant 0 : i32
    %c0_i32_1 = arith.constant 0 : i32
    return %arg1, %c0_i32, %c0_i32_0 : i32, i32, i32
  }
  func.func @transform_9(%arg0: i32, %arg1: i32) -> (i32, i32, i32) {
    %c0_i32 = arith.constant 0 : i32
    %c0_i32_0 = arith.constant 0 : i32
    %c0_i32_1 = arith.constant 0 : i32
    return %arg1, %c0_i32, %c0_i32_0 : i32, i32, i32
  }
  func.func @transform_10(%arg0: i32, %arg1: i32) -> (i32, i32, i32) {
    %c0_i32 = arith.constant 0 : i32
    %c0_i32_0 = arith.constant 0 : i32
    %c0_i32_1 = arith.constant 0 : i32
    return %arg1, %c0_i32, %c0_i32_0 : i32, i32, i32
  }
  func.func @transform_11(%arg0: i32, %arg1: i32) -> (i32, i32, i32) {
    %c0_i32 = arith.constant 0 : i32
    %c0_i32_0 = arith.constant 0 : i32
    %c0_i32_1 = arith.constant 0 : i32
    return %arg1, %c0_i32, %c0_i32_0 : i32, i32, i32
  }
  func.func @transform_12(%arg0: i32, %arg1: i32) -> (i32, i32, i32) {
    %c0_i32 = arith.constant 0 : i32
    %c0_i32_0 = arith.constant 0 : i32
    %c0_i32_1 = arith.constant 0 : i32
    return %arg1, %c0_i32, %c0_i32_0 : i32, i32, i32
  }
  func.func @transform_13(%arg0: i32, %arg1: i32) -> (i32, i32, i32) {
    %c0_i32 = arith.constant 0 : i32
    %c0_i32_0 = arith.constant 0 : i32
    %c0_i32_1 = arith.constant 0 : i32
    return %arg1, %c0_i32, %c0_i32_0 : i32, i32, i32
  }
  func.func @transform_14(%arg0: i32, %arg1: i32) -> (i32, i32, i32) {
    %c0_i32 = arith.constant 0 : i32
    %c0_i32_0 = arith.constant 0 : i32
    %c0_i32_1 = arith.constant 0 : i32
    return %arg1, %c0_i32, %c0_i32_0 : i32, i32, i32
  }
  func.func @transform_15(%arg0: i32, %arg1: i32) -> (i32, i32) {
    %c0_i32 = arith.constant 0 : i32
    %c0_i32_0 = arith.constant 0 : i32
    %c0_i32_1 = arith.constant 0 : i32
    return %c0_i32, %c0_i32_0 : i32, i32
  }
  func.func @transform_16(%arg0: i32, %arg1: i32) -> (i32, i32) {
    %c0_i32 = arith.constant 0 : i32
    %c0_i32_0 = arith.constant 0 : i32
    %c0_i32_1 = arith.constant 0 : i32
    return %c0_i32, %c0_i32_0 : i32, i32
  }
  func.func @transform_17(%arg0: i32, %arg1: i32) -> (i32, i32) {
    %c0_i32 = arith.constant 0 : i32
    %c0_i32_0 = arith.constant 0 : i32
    %c0_i32_1 = arith.constant 0 : i32
    return %c0_i32, %c0_i32_0 : i32, i32
  }
  func.func @transform_18(%arg0: i32, %arg1: i32) -> (i32, i32) {
    %c0_i32 = arith.constant 0 : i32
    %c0_i32_0 = arith.constant 0 : i32
    %c0_i32_1 = arith.constant 0 : i32
    return %c0_i32, %c0_i32_0 : i32, i32
  }
  func.func @transform_19(%arg0: i32, %arg1: i32) -> (i32, i32, i32) {
    %c0_i32 = arith.constant 0 : i32
    %c0_i32_0 = arith.constant 0 : i32
    %c0_i32_1 = arith.constant 0 : i32
    return %arg0, %c0_i32, %c0_i32_0 : i32, i32, i32
  }
}

</mosaic_0001>

<llo_original>
// kernel: prefix_forward.1
$region0: #{prefix_forward.1}
  #allocation0 [shape = 'u32[]', space=smem, size = 0x4, offset = 0x4, fixed_abs, tag = 'smem constant byte address 0x4 - core index']
  #allocation1 [shape = 'u32[72,128]{1,0:T(1,128)}', space=vmem, size = 0x9000, scoped, tag = 'internal scratch']
  #allocation2 [shape = 'f32[24,32]{1,0:T(8,128)}', space=vmem, size = 0x3000, scoped, tag = 'scratch operand']
  #allocation3 [shape = 's32[1]{0}', space=sflag, size = 0x4, scoped, tag = 'scratch operand']
  #allocation6 [shape = 's32[]', space=sflag, size = 0x4, offset = 0, fixed_abs, tag = 'sflag constant byte address 0x0 - dummy sync flag']
  %s0 = inlined_call_operand.vmem [shape: f32[48,32], index: 0, kind: input, shape index: {}]
  %s1 = inlined_call_operand.vmem [shape: f32[2,1,32], index: 1, kind: input, shape index: {}]
  %s2 = inlined_call_operand.vmem [shape: f32[2,1,32], index: 2, kind: input, shape index: {}]
  %s3 = inlined_call_operand.vmem [shape: bf16[2,32,112], index: 3, kind: input, shape index: {}]
  %s4 = inlined_call_operand.vmem [shape: f32[2,1,112], index: 4, kind: input, shape index: {}]
  %s5 = inlined_call_operand.vmem [shape: bf16[2,16,64], index: 5, kind: input, shape index: {}]
  %s6 = inlined_call_operand.vmem [shape: f32[2,1,64], index: 6, kind: input, shape index: {}]
  %s7 = inlined_call_operand.vmem [shape: bf16[2,32,32], index: 7, kind: input, shape index: {}]
  %s8 = inlined_call_operand.vmem [shape: f32[2,1,32], index: 8, kind: input, shape index: {}]
  %s9 = inlined_call_operand.vmem [shape: f32[2,1,32], index: 9, kind: input, shape index: {}]
  %s10 = inlined_call_operand.vmem [shape: f32[2,1,32], index: 10, kind: input, shape index: {}]
  %s11 = inlined_call_operand.vmem [shape: bf16[2,32,128], index: 11, kind: input, shape index: {}]
  %s12 = inlined_call_operand.vmem [shape: f32[2,1,128], index: 12, kind: input, shape index: {}]
  %s13 = inlined_call_operand.vmem [shape: bf16[2,128,32], index: 13, kind: input, shape index: {}]
  %s14 = inlined_call_operand.vmem [shape: f32[2,1,32], index: 14, kind: input, shape index: {}]
  %s15 = inlined_call_operand.vmem [shape: f32[1,32], index: 15, kind: input, shape index: {}]
  %s16 = inlined_call_operand.vmem [shape: f32[1,32], index: 16, kind: input, shape index: {}]
  %s17 = inlined_call_operand.vmem [shape: f32[32,128], index: 17, kind: input, shape index: {}]
  %s18 = inlined_call_operand.vmem [shape: f32[1,128], index: 18, kind: input, shape index: {}]
  %s19 = inlined_call_operand.hbm [shape: f32[2,1,128], index: 19, kind: output, shape index: {}]
  %s20 = sld [smem:[#allocation0]]
  $region132: #{prefix_forward.1} parent=0
    _
  %s22 = ssub.s32 1, %s20
  %s23 = scalar_select 0, %s22, %s20
  $region1: #{prefix_forward.1} parent=0
    #allocation4 [shape = 'u8[1024]{0}', space=vmem, size = 0x400, scoped, tag = 'output window, operand 0']
    #allocation5 [shape = 's32[2]{0}', space=sflag, size = 0x8, scoped, tag = 'scoped memory for prefix_forward.1']
    %24 = vsyncpa [#allocation5], 0
    %s25 = scalar_lea.sflag [#allocation5], 1
    %26 = vsyncpa %s25, 0
    loop: start=0, step=1, limit=6
    $region2: #{prefix_forward.1} parent=1 // loop_pre_header
      _
    $region3: #{prefix_forward.1} parent=1 // loop_header
      %s28 = sphi 0, %s32
      %p29 = scmp.ge.s32.totalorder %s28, 6
      %s35 = sphi 0, %s47
      %s36 = sphi 0, %s43
      %s37 = sphi 0, %s35
      %s38 = sphi 0, %s36
      %s39 = sphi 0, %s37
      %s40 = sphi 0, %s38
      %s50 = sphi 0, %s52
      %s53 = sphi 0, %s50
      %s54 = sphi 0, %s53
      %s70 = sphi 0, %s54
      %s76 = sphi 0, %s78
      %s79 = sphi 0, %s76
      %s80 = sphi 0, %s79
      %s96 = sphi 0, %s80
      %s102 = sphi 0, %s104
      %s105 = sphi 0, %s102
      %s106 = sphi 0, %s105
      %s122 = sphi 0, %s106
      %s128 = sphi 0, %s130
      %s131 = sphi 0, %s128
      %s132 = sphi 0, %s131
      %s148 = sphi 0, %s132
      %s154 = sphi 0, %s156
      %s157 = sphi 0, %s154
      %s158 = sphi 0, %s157
      %s174 = sphi 0, %s158
      %s180 = sphi 0, %s182
      %s183 = sphi 0, %s180
      %s184 = sphi 0, %s183
      %s200 = sphi 0, %s184
      %s206 = sphi 0, %s208
      %s209 = sphi 0, %s206
      %s210 = sphi 0, %s209
      %s226 = sphi 0, %s210
      %s232 = sphi 0, %s234
      %s235 = sphi 0, %s232
      %s236 = sphi 0, %s235
      %s252 = sphi 0, %s236
      %s258 = sphi 0, %s260
      %s261 = sphi 0, %s258
      %s262 = sphi 0, %s261
      %s278 = sphi 0, %s262
      %s284 = sphi 0, %s286
      %s287 = sphi 0, %s284
      %s288 = sphi 0, %s287
      %s304 = sphi 0, %s288
      %s310 = sphi 0, %s312
      %s313 = sphi 0, %s310
      %s314 = sphi 0, %s313
      %s330 = sphi 0, %s314
      %s336 = sphi 0, %s338
      %s339 = sphi 0, %s336
      %s340 = sphi 0, %s339
      %s356 = sphi 0, %s340
      %s362 = sphi 0, %s364
      %s365 = sphi 0, %s362
      %s366 = sphi 0, %s365
      %s382 = sphi 0, %s366
      %s388 = sphi 0, %s390
      %s391 = sphi 0, %s388
      %s392 = sphi 0, %s391
      %s408 = sphi 0, %s392
      %s412 = sphi 0, %s412
      %s414 = sphi 0, %s412
      %s415 = sphi 0, %s414
      %s429 = sphi 0, %s415
      %s433 = sphi 0, %s433
      %s435 = sphi 0, %s433
      %s436 = sphi 0, %s435
      %s450 = sphi 0, %s436
      %s454 = sphi 0, %s454
      %s456 = sphi 0, %s454
      %s457 = sphi 0, %s456
      %s471 = sphi 0, %s457
      %s475 = sphi 0, %s475
      %s477 = sphi 0, %s475
      %s478 = sphi 0, %s477
      %s492 = sphi 0, %s478
      %s498 = sphi 0, %s500
      %s501 = sphi 0, %s498
      %s502 = sphi 0, %s501
      %s518 = sphi 0, %s502
    $region4: #{prefix_forward.1} parent=1 // loop_header_branch
      %31 = sbr.rel (%p29) target = $region8
    $region5: #{prefix_forward.1} parent=1 // loop_body
      %s33 = ssub.s32 %s28, 1
      %s34 = ssub.s32 %s28, 2
      %s41 = sadd.s32 1, %s36
      %p42 = scmp.ge.s32.totalorder %s41, 2
      %s43 = scalar_select %p42, 0, %s41
      %s44 = sadd.s32 1, %s35
      %s45 = scalar_select %p42, %s44, %s35
      %p46 = scmp.ge.s32.totalorder %s45, 2
      %s47 = scalar_select %p46, 0, %s45
      %s48 = ssub.s32 %s36, %s43
      %p49 = scmp.eq.s32.totalorder %s48, 0
      %s51 = sadd.s32 %s50, 1
      %s52 = scalar_select %p49, %s50, %s51
      %p55 = pneg %p49
      %p56 = scmp.eq.s32.totalorder %s28, 3
      %p57 = por %p55, %p56
      %p58 = scmp.ne.s32.totalorder %s50, %s53
      %p59 = scmp.eq.s32.totalorder %s28, 0
      %p60 = por %p58, %p59
      %p61 = scmp.ne.s32.totalorder %s50, %s53
      %p62 = scmp.eq.s32.totalorder %s33, 3
      %p63 = por %p61, %p62
      %p64 = scmp.ne.s32.totalorder %s53, %s54
      %p65 = scmp.eq.s32.totalorder %s33, 0
      %p66 = por %p64, %p65
      %p67 = scmp.ne.s32.totalorder %s53, %s54
      %p68 = scmp.eq.s32.totalorder %s34, 3
      %p69 = por %p67, %p68
      %p71 = scmp.ne.s32.totalorder %s54, %s70
      %p72 = scmp.eq.s32.totalorder %s34, 0
      %p73 = por %p71, %p72
      %s74 = ssub.s32 %s36, %s43
      %p75 = scmp.eq.s32.totalorder %s74, 0
      %s77 = sadd.s32 %s76, 1
      %s78 = scalar_select %p75, %s76, %s77
      %p81 = pneg %p75
      %p82 = scmp.eq.s32.totalorder %s28, 3
      %p83 = por %p81, %p82
      %p84 = scmp.ne.s32.totalorder %s76, %s79
      %p85 = scmp.eq.s32.totalorder %s28, 0
      %p86 = por %p84, %p85
      %p87 = scmp.ne.s32.totalorder %s76, %s79
      %p88 = scmp.eq.s32.totalorder %s33, 3
      %p89 = por %p87, %p88
      %p90 = scmp.ne.s32.totalorder %s79, %s80
      %p91 = scmp.eq.s32.totalorder %s33, 0
      %p92 = por %p90, %p91
      %p93 = scmp.ne.s32.totalorder %s79, %s80
      %p94 = scmp.eq.s32.totalorder %s34, 3
      %p95 = por %p93, %p94
      %p97 = scmp.ne.s32.totalorder %s80, %s96
      %p98 = scmp.eq.s32.totalorder %s34, 0
      %p99 = por %p97, %p98
      %s100 = ssub.s32 %s36, %s43
      %p101 = scmp.eq.s32.totalorder %s100, 0
      %s103 = sadd.s32 %s102, 1
      %s104 = scalar_select %p101, %s102, %s103
      %p107 = pneg %p101
      %p108 = scmp.eq.s32.totalorder %s28, 3
      %p109 = por %p107, %p108
      %p110 = scmp.ne.s32.totalorder %s102, %s105
      %p111 = scmp.eq.s32.totalorder %s28, 0
      %p112 = por %p110, %p111
      %p113 = scmp.ne.s32.totalorder %s102, %s105
      %p114 = scmp.eq.s32.totalorder %s33, 3
      %p115 = por %p113, %p114
      %p116 = scmp.ne.s32.totalorder %s105, %s106
      %p117 = scmp.eq.s32.totalorder %s33, 0
      %p118 = por %p116, %p117
      %p119 = scmp.ne.s32.totalorder %s105, %s106
      %p120 = scmp.eq.s32.totalorder %s34, 3
      %p121 = por %p119, %p120
      %p123 = scmp.ne.s32.totalorder %s106, %s122
      %p124 = scmp.eq.s32.totalorder %s34, 0
      %p125 = por %p123, %p124
      %s126 = ssub.s32 %s36, %s43
      %p127 = scmp.eq.s32.totalorder %s126, 0
      %s129 = sadd.s32 %s128, 1
      %s130 = scalar_select %p127, %s128, %s129
      %p133 = pneg %p127
      %p134 = scmp.eq.s32.totalorder %s28, 3
      %p135 = por %p133, %p134
      %p136 = scmp.ne.s32.totalorder %s128, %s131
      %p137 = scmp.eq.s32.totalorder %s28, 0
      %p138 = por %p136, %p137
      %p139 = scmp.ne.s32.totalorder %s128, %s131
      %p140 = scmp.eq.s32.totalorder %s33, 3
      %p141 = por %p139, %p140
      %p142 = scmp.ne.s32.totalorder %s131, %s132
      %p143 = scmp.eq.s32.totalorder %s33, 0
      %p144 = por %p142, %p143
      %p145 = scmp.ne.s32.totalorder %s131, %s132
      %p146 = scmp.eq.s32.totalorder %s34, 3
      %p147 = por %p145, %p146
      %p149 = scmp.ne.s32.totalorder %s132, %s148
      %p150 = scmp.eq.s32.totalorder %s34, 0
      %p151 = por %p149, %p150
      %s152 = ssub.s32 %s36, %s43
      %p153 = scmp.eq.s32.totalorder %s152, 0
      %s155 = sadd.s32 %s154, 1
      %s156 = scalar_select %p153, %s154, %s155
      %p159 = pneg %p153
      %p160 = scmp.eq.s32.totalorder %s28, 3
      %p161 = por %p159, %p160
      %p162 = scmp.ne.s32.totalorder %s154, %s157
      %p163 = scmp.eq.s32.totalorder %s28, 0
      %p164 = por %p162, %p163
      %p165 = scmp.ne.s32.totalorder %s154, %s157
      %p166 = scmp.eq.s32.totalorder %s33, 3
      %p167 = por %p165, %p166
      %p168 = scmp.ne.s32.totalorder %s157, %s158
      %p169 = scmp.eq.s32.totalorder %s33, 0
      %p170 = por %p168, %p169
      %p171 = scmp.ne.s32.totalorder %s157, %s158
      %p172 = scmp.eq.s32.totalorder %s34, 3
      %p173 = por %p171, %p172
      %p175 = scmp.ne.s32.totalorder %s158, %s174
      %p176 = scmp.eq.s32.totalorder %s34, 0
      %p177 = por %p175, %p176
      %s178 = ssub.s32 %s36, %s43
      %p179 = scmp.eq.s32.totalorder %s178, 0
      %s181 = sadd.s32 %s180, 1
      %s182 = scalar_select %p179, %s180, %s181
      %p185 = pneg %p179
      %p186 = scmp.eq.s32.totalorder %s28, 3
      %p187 = por %p185, %p186
      %p188 = scmp.ne.s32.totalorder %s180, %s183
      %p189 = scmp.eq.s32.totalorder %s28, 0
      %p190 = por %p188, %p189
      %p191 = scmp.ne.s32.totalorder %s180, %s183
      %p192 = scmp.eq.s32.totalorder %s33, 3
      %p193 = por %p191, %p192
      %p194 = scmp.ne.s32.totalorder %s183, %s184
      %p195 = scmp.eq.s32.totalorder %s33, 0
      %p196 = por %p194, %p195
      %p197 = scmp.ne.s32.totalorder %s183, %s184
      %p198 = scmp.eq.s32.totalorder %s34, 3
      %p199 = por %p197, %p198
      %p201 = scmp.ne.s32.totalorder %s184, %s200
      %p202 = scmp.eq.s32.totalorder %s34, 0
      %p203 = por %p201, %p202
      %s204 = ssub.s32 %s36, %s43
      %p205 = scmp.eq.s32.totalorder %s204, 0
      %s207 = sadd.s32 %s206, 1
      %s208 = scalar_select %p205, %s206, %s207
      %p211 = pneg %p205
      %p212 = scmp.eq.s32.totalorder %s28, 3
      %p213 = por %p211, %p212
      %p214 = scmp.ne.s32.totalorder %s206, %s209
      %p215 = scmp.eq.s32.totalorder %s28, 0
      %p216 = por %p214, %p215
      %p217 = scmp.ne.s32.totalorder %s206, %s209
      %p218 = scmp.eq.s32.totalorder %s33, 3
      %p219 = por %p217, %p218
      %p220 = scmp.ne.s32.totalorder %s209, %s210
      %p221 = scmp.eq.s32.totalorder %s33, 0
      %p222 = por %p220, %p221
      %p223 = scmp.ne.s32.totalorder %s209, %s210
      %p224 = scmp.eq.s32.totalorder %s34, 3
      %p225 = por %p223, %p224
      %p227 = scmp.ne.s32.totalorder %s210, %s226
      %p228 = scmp.eq.s32.totalorder %s34, 0
      %p229 = por %p227, %p228
      %s230 = ssub.s32 %s36, %s43
      %p231 = scmp.eq.s32.totalorder %s230, 0
      %s233 = sadd.s32 %s232, 1
      %s234 = scalar_select %p231, %s232, %s233
      %p237 = pneg %p231
      %p238 = scmp.eq.s32.totalorder %s28, 3
      %p239 = por %p237, %p238
      %p240 = scmp.ne.s32.totalorder %s232, %s235
      %p241 = scmp.eq.s32.totalorder %s28, 0
      %p242 = por %p240, %p241
      %p243 = scmp.ne.s32.totalorder %s232, %s235
      %p244 = scmp.eq.s32.totalorder %s33, 3
      %p245 = por %p243, %p244
      %p246 = scmp.ne.s32.totalorder %s235, %s236
      %p247 = scmp.eq.s32.totalorder %s33, 0
      %p248 = por %p246, %p247
      %p249 = scmp.ne.s32.totalorder %s235, %s236
      %p250 = scmp.eq.s32.totalorder %s34, 3
      %p251 = por %p249, %p250
      %p253 = scmp.ne.s32.totalorder %s236, %s252
      %p254 = scmp.eq.s32.totalorder %s34, 0
      %p255 = por %p253, %p254
      %s256 = ssub.s32 %s36, %s43
      %p257 = scmp.eq.s32.totalorder %s256, 0
      %s259 = sadd.s32 %s258, 1
      %s260 = scalar_select %p257, %s258, %s259
      %p263 = pneg %p257
      %p264 = scmp.eq.s32.totalorder %s28, 3
      %p265 = por %p263, %p264
      %p266 = scmp.ne.s32.totalorder %s258, %s261
      %p267 = scmp.eq.s32.totalorder %s28, 0
      %p268 = por %p266, %p267
      %p269 = scmp.ne.s32.totalorder %s258, %s261
      %p270 = scmp.eq.s32.totalorder %s33, 3
      %p271 = por %p269, %p270
      %p272 = scmp.ne.s32.totalorder %s261, %s262
      %p273 = scmp.eq.s32.totalorder %s33, 0
      %p274 = por %p272, %p273
      %p275 = scmp.ne.s32.totalorder %s261, %s262
      %p276 = scmp.eq.s32.totalorder %s34, 3
      %p277 = por %p275, %p276
      %p279 = scmp.ne.s32.totalorder %s262, %s278
      %p280 = scmp.eq.s32.totalorder %s34, 0
      %p281 = por %p279, %p280
      %s282 = ssub.s32 %s36, %s43
      %p283 = scmp.eq.s32.totalorder %s282, 0
      %s285 = sadd.s32 %s284, 1
      %s286 = scalar_select %p283, %s284, %s285
      %p289 = pneg %p283
      %p290 = scmp.eq.s32.totalorder %s28, 3
      %p291 = por %p289, %p290
      %p292 = scmp.ne.s32.totalorder %s284, %s287
      %p293 = scmp.eq.s32.totalorder %s28, 0
      %p294 = por %p292, %p293
      %p295 = scmp.ne.s32.totalorder %s284, %s287
      %p296 = scmp.eq.s32.totalorder %s33, 3
      %p297 = por %p295, %p296
      %p298 = scmp.ne.s32.totalorder %s287, %s288
      %p299 = scmp.eq.s32.totalorder %s33, 0
      %p300 = por %p298, %p299
      %p301 = scmp.ne.s32.totalorder %s287, %s288
      %p302 = scmp.eq.s32.totalorder %s34, 3
      %p303 = por %p301, %p302
      %p305 = scmp.ne.s32.totalorder %s288, %s304
      %p306 = scmp.eq.s32.totalorder %s34, 0
      %p307 = por %p305, %p306
      %s308 = ssub.s32 %s36, %s43
      %p309 = scmp.eq.s32.totalorder %s308, 0
      %s311 = sadd.s32 %s310, 1
      %s312 = scalar_select %p309, %s310, %s311
      %p315 = pneg %p309
      %p316 = scmp.eq.s32.totalorder %s28, 3
      %p317 = por %p315, %p316
      %p318 = scmp.ne.s32.totalorder %s310, %s313
      %p319 = scmp.eq.s32.totalorder %s28, 0
      %p320 = por %p318, %p319
      %p321 = scmp.ne.s32.totalorder %s310, %s313
      %p322 = scmp.eq.s32.totalorder %s33, 3
      %p323 = por %p321, %p322
      %p324 = scmp.ne.s32.totalorder %s313, %s314
      %p325 = scmp.eq.s32.totalorder %s33, 0
      %p326 = por %p324, %p325
      %p327 = scmp.ne.s32.totalorder %s313, %s314
      %p328 = scmp.eq.s32.totalorder %s34, 3
      %p329 = por %p327, %p328
      %p331 = scmp.ne.s32.totalorder %s314, %s330
      %p332 = scmp.eq.s32.totalorder %s34, 0
      %p333 = por %p331, %p332
      %s334 = ssub.s32 %s36, %s43
      %p335 = scmp.eq.s32.totalorder %s334, 0
      %s337 = sadd.s32 %s336, 1
      %s338 = scalar_select %p335, %s336, %s337
      %p341 = pneg %p335
      %p342 = scmp.eq.s32.totalorder %s28, 3
      %p343 = por %p341, %p342
      %p344 = scmp.ne.s32.totalorder %s336, %s339
      %p345 = scmp.eq.s32.totalorder %s28, 0
      %p346 = por %p344, %p345
      %p347 = scmp.ne.s32.totalorder %s336, %s339
      %p348 = scmp.eq.s32.totalorder %s33, 3
      %p349 = por %p347, %p348
      %p350 = scmp.ne.s32.totalorder %s339, %s340
      %p351 = scmp.eq.s32.totalorder %s33, 0
      %p352 = por %p350, %p351
      %p353 = scmp.ne.s32.totalorder %s339, %s340
      %p354 = scmp.eq.s32.totalorder %s34, 3
      %p355 = por %p353, %p354
      %p357 = scmp.ne.s32.totalorder %s340, %s356
      %p358 = scmp.eq.s32.totalorder %s34, 0
      %p359 = por %p357, %p358
      %s360 = ssub.s32 %s36, %s43
      %p361 = scmp.eq.s32.totalorder %s360, 0
      %s363 = sadd.s32 %s362, 1
      %s364 = scalar_select %p361, %s362, %s363
      %p367 = pneg %p361
      %p368 = scmp.eq.s32.totalorder %s28, 3
      %p369 = por %p367, %p368
      %p370 = scmp.ne.s32.totalorder %s362, %s365
      %p371 = scmp.eq.s32.totalorder %s28, 0
      %p372 = por %p370, %p371
      %p373 = scmp.ne.s32.totalorder %s362, %s365
      %p374 = scmp.eq.s32.totalorder %s33, 3
      %p375 = por %p373, %p374
      %p376 = scmp.ne.s32.totalorder %s365, %s366
      %p377 = scmp.eq.s32.totalorder %s33, 0
      %p378 = por %p376, %p377
      %p379 = scmp.ne.s32.totalorder %s365, %s366
      %p380 = scmp.eq.s32.totalorder %s34, 3
      %p381 = por %p379, %p380
      %p383 = scmp.ne.s32.totalorder %s366, %s382
      %p384 = scmp.eq.s32.totalorder %s34, 0
      %p385 = por %p383, %p384
      %s386 = ssub.s32 %s36, %s43
      %p387 = scmp.eq.s32.totalorder %s386, 0
      %s389 = sadd.s32 %s388, 1
      %s390 = scalar_select %p387, %s388, %s389
      %p393 = pneg %p387
      %p394 = scmp.eq.s32.totalorder %s28, 3
      %p395 = por %p393, %p394
      %p396 = scmp.ne.s32.totalorder %s388, %s391
      %p397 = scmp.eq.s32.totalorder %s28, 0
      %p398 = por %p396, %p397
      %p399 = scmp.ne.s32.totalorder %s388, %s391
      %p400 = scmp.eq.s32.totalorder %s33, 3
      %p401 = por %p399, %p400
      %p402 = scmp.ne.s32.totalorder %s391, %s392
      %p403 = scmp.eq.s32.totalorder %s33, 0
      %p404 = por %p402, %p403
      %p405 = scmp.ne.s32.totalorder %s391, %s392
      %p406 = scmp.eq.s32.totalorder %s34, 3
      %p407 = por %p405, %p406
      %p409 = scmp.ne.s32.totalorder %s392, %s408
      %p410 = scmp.eq.s32.totalorder %s34, 0
      %p411 = por %p409, %p410
      %s413 = sadd.s32 %s412, 1
      %p416 = scmp.eq.s32.totalorder %s28, 3
      %p417 = scmp.ne.s32.totalorder %s412, %s414
      %p418 = scmp.eq.s32.totalorder %s28, 0
      %p419 = por %p417, %p418
      %p420 = scmp.ne.s32.totalorder %s412, %s414
      %p421 = scmp.eq.s32.totalorder %s33, 3
      %p422 = por %p420, %p421
      %p423 = scmp.ne.s32.totalorder %s414, %s415
      %p424 = scmp.eq.s32.totalorder %s33, 0
      %p425 = por %p423, %p424
      %p426 = scmp.ne.s32.totalorder %s414, %s415
      %p427 = scmp.eq.s32.totalorder %s34, 3
      %p428 = por %p426, %p427
      %p430 = scmp.ne.s32.totalorder %s415, %s429
      %p431 = scmp.eq.s32.totalorder %s34, 0
      %p432 = por %p430, %p431
      %s434 = sadd.s32 %s433, 1
      %p437 = scmp.eq.s32.totalorder %s28, 3
      %p438 = scmp.ne.s32.totalorder %s433, %s435
      %p439 = scmp.eq.s32.totalorder %s28, 0
      %p440 = por %p438, %p439
      %p441 = scmp.ne.s32.totalorder %s433, %s435
      %p442 = scmp.eq.s32.totalorder %s33, 3
      %p443 = por %p441, %p442
      %p444 = scmp.ne.s32.totalorder %s435, %s436
      %p445 = scmp.eq.s32.totalorder %s33, 0
      %p446 = por %p444, %p445
      %p447 = scmp.ne.s32.totalorder %s435, %s436
      %p448 = scmp.eq.s32.totalorder %s34, 3
      %p449 = por %p447, %p448
      %p451 = scmp.ne.s32.totalorder %s436, %s450
      %p452 = scmp.eq.s32.totalorder %s34, 0
      %p453 = por %p451, %p452
      %s455 = sadd.s32 %s454, 1
      %p458 = scmp.eq.s32.totalorder %s28, 3
      %p459 = scmp.ne.s32.totalorder %s454, %s456
      %p460 = scmp.eq.s32.totalorder %s28, 0
      %p461 = por %p459, %p460
      %p462 = scmp.ne.s32.totalorder %s454, %s456
      %p463 = scmp.eq.s32.totalorder %s33, 3
      %p464 = por %p462, %p463
      %p465 = scmp.ne.s32.totalorder %s456, %s457
      %p466 = scmp.eq.s32.totalorder %s33, 0
      %p467 = por %p465, %p466
      %p468 = scmp.ne.s32.totalorder %s456, %s457
      %p469 = scmp.eq.s32.totalorder %s34, 3
      %p470 = por %p468, %p469
      %p472 = scmp.ne.s32.totalorder %s457, %s471
      %p473 = scmp.eq.s32.totalorder %s34, 0
      %p474 = por %p472, %p473
      %s476 = sadd.s32 %s475, 1
      %p479 = scmp.eq.s32.totalorder %s28, 3
      %p480 = scmp.ne.s32.totalorder %s475, %s477
      %p481 = scmp.eq.s32.totalorder %s28, 0
      %p482 = por %p480, %p481
      %p483 = scmp.ne.s32.totalorder %s475, %s477
      %p484 = scmp.eq.s32.totalorder %s33, 3
      %p485 = por %p483, %p484
      %p486 = scmp.ne.s32.totalorder %s477, %s478
      %p487 = scmp.eq.s32.totalorder %s33, 0
      %p488 = por %p486, %p487
      %p489 = scmp.ne.s32.totalorder %s477, %s478
      %p490 = scmp.eq.s32.totalorder %s34, 3
      %p491 = por %p489, %p490
      %p493 = scmp.ne.s32.totalorder %s478, %s492
      %p494 = scmp.eq.s32.totalorder %s34, 0
      %p495 = por %p493, %p494
      %s496 = ssub.s32 %s35, %s47
      %p497 = scmp.eq.s32.totalorder %s496, 0
      %s499 = sadd.s32 %s498, 1
      %s500 = scalar_select %p497, %s498, %s499
      %p503 = pneg %p497
      %p504 = scmp.eq.s32.totalorder %s28, 3
      %p505 = por %p503, %p504
      %p506 = scmp.ne.s32.totalorder %s498, %s501
      %p507 = scmp.eq.s32.totalorder %s28, 0
      %p508 = por %p506, %p507
      %p509 = scmp.ne.s32.totalorder %s498, %s501
      %p510 = scmp.eq.s32.totalorder %s33, 3
      %p511 = por %p509, %p510
      %p512 = scmp.ne.s32.totalorder %s501, %s502
      %p513 = scmp.eq.s32.totalorder %s33, 0
      %p514 = por %p512, %p513
      %p515 = scmp.ne.s32.totalorder %s501, %s502
      %p516 = scmp.eq.s32.totalorder %s34, 3
      %p517 = por %p515, %p516
      %p519 = scmp.ne.s32.totalorder %s502, %s518
      %p520 = scmp.eq.s32.totalorder %s34, 0
      %p521 = por %p519, %p520
      %p522 = scmp.le.s32.totalorder 1, %s28
      %p523 = scmp.lt.s32.totalorder %s28, 5
      %p524 = pnand %p522, %p523
      %p525 = pneg %p524
      // Predicated region
      $region9: #{prefix_forward.1} parent=5 // pred_check
        _
      $region10: #{prefix_forward.1} parent=5 // pred_check_branch
        %527 = sbr.rel (%p524) target = $region12
      $region11: #{prefix_forward.1} parent=5 // pred_region
        %s528 = ssub.s32 %s28, 1
        // Predicated region
        $region13: #{prefix_forward.1} parent=11 // pred_check
          %p529 = pneg %p425
        $region14: #{prefix_forward.1} parent=11 // pred_check_branch
          %531 = sbr.rel (%p529) target = $region16
        $region15: #{prefix_forward.1} parent=11 // pred_region
          _
        $region16: #{prefix_forward.1} parent=11 // pred_fallthru
          _
        // Predicated region
        $region17: #{prefix_forward.1} parent=11 // pred_check
          %p532 = pneg %p446
        $region18: #{prefix_forward.1} parent=11 // pred_check_branch
          %534 = sbr.rel (%p532) target = $region20
        $region19: #{prefix_forward.1} parent=11 // pred_region
          _
        $region20: #{prefix_forward.1} parent=11 // pred_fallthru
          _
        // Predicated region
        $region21: #{prefix_forward.1} parent=11 // pred_check
          %p535 = pneg %p467
        $region22: #{prefix_forward.1} parent=11 // pred_check_branch
          %537 = sbr.rel (%p535) target = $region24
        $region23: #{prefix_forward.1} parent=11 // pred_region
          _
        $region24: #{prefix_forward.1} parent=11 // pred_fallthru
          _
        // Predicated region
        $region25: #{prefix_forward.1} parent=11 // pred_check
          %p538 = pneg %p488
        $region26: #{prefix_forward.1} parent=11 // pred_check_branch
          %540 = sbr.rel (%p538) target = $region28
        $region27: #{prefix_forward.1} parent=11 // pred_region
          _
        $region28: #{prefix_forward.1} parent=11 // pred_fallthru
          _
      $region12: #{prefix_forward.1} parent=5 // pred_fallthru
        _
      %p541 = scmp.lt.s32.totalorder %s28, 4
      // Predicated region
      $region29: #{prefix_forward.1} parent=5 // pred_check
        %p542 = pneg %p541
      $region30: #{prefix_forward.1} parent=5 // pred_check_branch
        %544 = sbr.rel (%p542) target = $region32
      $region31: #{prefix_forward.1} parent=5 // pred_region
        // Predicated region
        $region33: #{prefix_forward.1} parent=31 // pred_check
          %p545 = pneg %p60
        $region34: #{prefix_forward.1} parent=31 // pred_check_branch
          %547 = sbr.rel (%p545) target = $region36
        $region35: #{prefix_forward.1} parent=31 // pred_region
          %p548 = scmp.lt.s32.totalorder %s36, 1
          %s549 = scalar_select %p548, %s36, 1
          %s550 = scalar_lea.vmem %s1, %s549
        $region36: #{prefix_forward.1} parent=31 // pred_fallthru
          _
        // Predicated region
        $region37: #{prefix_forward.1} parent=31 // pred_check
          %p551 = pneg %p86
        $region38: #{prefix_forward.1} parent=31 // pred_check_branch
          %553 = sbr.rel (%p551) target = $region40
        $region39: #{prefix_forward.1} parent=31 // pred_region
          %p554 = scmp.lt.s32.totalorder %s36, 1
          %s555 = scalar_select %p554, %s36, 1
          %s556 = scalar_lea.vmem %s2, %s555
        $region40: #{prefix_forward.1} parent=31 // pred_fallthru
          _
        // Predicated region
        $region41: #{prefix_forward.1} parent=31 // pred_check
          %p557 = pneg %p112
        $region42: #{prefix_forward.1} parent=31 // pred_check_branch
          %559 = sbr.rel (%p557) target = $region44
        $region43: #{prefix_forward.1} parent=31 // pred_region
          %p560 = scmp.lt.s32.totalorder %s36, 1
          %s561 = scalar_select %p560, %s36, 1
          %s562 = smul.addr %s561, 4
          %s563 = smul.addr %s562, 4
          %s564 = scalar_lea.vmem %s3, %s563
        $region44: #{prefix_forward.1} parent=31 // pred_fallthru
          _
        // Predicated region
        $region45: #{prefix_forward.1} parent=31 // pred_check
          %p565 = pneg %p138
        $region46: #{prefix_forward.1} parent=31 // pred_check_branch
          %567 = sbr.rel (%p565) target = $region48
        $region47: #{prefix_forward.1} parent=31 // pred_region
          %p568 = scmp.lt.s32.totalorder %s36, 1
          %s569 = scalar_select %p568, %s36, 1
          %s570 = scalar_lea.vmem %s4, %s569
        $region48: #{prefix_forward.1} parent=31 // pred_fallthru
          _
        // Predicated region
        $region49: #{prefix_forward.1} parent=31 // pred_check
          %p571 = pneg %p164
        $region50: #{prefix_forward.1} parent=31 // pred_check_branch
          %573 = sbr.rel (%p571) target = $region52
        $region51: #{prefix_forward.1} parent=31 // pred_region
          %p574 = scmp.lt.s32.totalorder %s36, 1
          %s575 = scalar_select %p574, %s36, 1
          %s576 = smul.addr %s575, 2
          %s577 = smul.addr %s576, 4
          %s578 = scalar_lea.vmem %s5, %s577
        $region52: #{prefix_forward.1} parent=31 // pred_fallthru
          _
        // Predicated region
        $region53: #{prefix_forward.1} parent=31 // pred_check
          %p579 = pneg %p190
        $region54: #{prefix_forward.1} parent=31 // pred_check_branch
          %581 = sbr.rel (%p579) target = $region56
        $region55: #{prefix_forward.1} parent=31 // pred_region
          %p582 = scmp.lt.s32.totalorder %s36, 1
          %s583 = scalar_select %p582, %s36, 1
          %s584 = scalar_lea.vmem %s6, %s583
        $region56: #{prefix_forward.1} parent=31 // pred_fallthru
          _
        // Predicated region
        $region57: #{prefix_forward.1} parent=31 // pred_check
          %p585 = pneg %p216
        $region58: #{prefix_forward.1} parent=31 // pred_check_branch
          %587 = sbr.rel (%p585) target = $region60
        $region59: #{prefix_forward.1} parent=31 // pred_region
          %p588 = scmp.lt.s32.totalorder %s36, 1
          %s589 = scalar_select %p588, %s36, 1
          %s590 = smul.addr %s589, 4
          %s591 = smul.addr %s590, 4
          %s592 = scalar_lea.vmem %s7, %s591
        $region60: #{prefix_forward.1} parent=31 // pred_fallthru
          _
        // Predicated region
        $region61: #{prefix_forward.1} parent=31 // pred_check
          %p593 = pneg %p242
        $region62: #{prefix_forward.1} parent=31 // pred_check_branch
          %595 = sbr.rel (%p593) target = $region64
        $region63: #{prefix_forward.1} parent=31 // pred_region
          %p596 = scmp.lt.s32.totalorder %s36, 1
          %s597 = scalar_select %p596, %s36, 1
          %s598 = scalar_lea.vmem %s8, %s597
        $region64: #{prefix_forward.1} parent=31 // pred_fallthru
          _
        // Predicated region
        $region65: #{prefix_forward.1} parent=31 // pred_check
          %p599 = pneg %p268
        $region66: #{prefix_forward.1} parent=31 // pred_check_branch
          %601 = sbr.rel (%p599) target = $region68
        $region67: #{prefix_forward.1} parent=31 // pred_region
          %p602 = scmp.lt.s32.totalorder %s36, 1
          %s603 = scalar_select %p602, %s36, 1
          %s604 = scalar_lea.vmem %s9, %s603
        $region68: #{prefix_forward.1} parent=31 // pred_fallthru
          _
        // Predicated region
        $region69: #{prefix_forward.1} parent=31 // pred_check
          %p605 = pneg %p294
        $region70: #{prefix_forward.1} parent=31 // pred_check_branch
          %607 = sbr.rel (%p605) target = $region72
        $region71: #{prefix_forward.1} parent=31 // pred_region
          %p608 = scmp.lt.s32.totalorder %s36, 1
          %s609 = scalar_select %p608, %s36, 1
          %s610 = scalar_lea.vmem %s10, %s609
        $region72: #{prefix_forward.1} parent=31 // pred_fallthru
          _
        // Predicated region
        $region73: #{prefix_forward.1} parent=31 // pred_check
          %p611 = pneg %p320
        $region74: #{prefix_forward.1} parent=31 // pred_check_branch
          %613 = sbr.rel (%p611) target = $region76
        $region75: #{prefix_forward.1} parent=31 // pred_region
          %p614 = scmp.lt.s32.totalorder %s36, 1
          %s615 = scalar_select %p614, %s36, 1
          %s616 = smul.addr %s615, 4
          %s617 = smul.addr %s616, 4
          %s618 = scalar_lea.vmem %s11, %s617
        $region76: #{prefix_forward.1} parent=31 // pred_fallthru
          _
        // Predicated region
        $region77: #{prefix_forward.1} parent=31 // pred_check
          %p619 = pneg %p346
        $region78: #{prefix_forward.1} parent=31 // pred_check_branch
          %621 = sbr.rel (%p619) target = $region80
        $region79: #{prefix_forward.1} parent=31 // pred_region
          %p622 = scmp.lt.s32.totalorder %s36, 1
          %s623 = scalar_select %p622, %s36, 1
          %s624 = scalar_lea.vmem %s12, %s623
        $region80: #{prefix_forward.1} parent=31 // pred_fallthru
          _
        // Predicated region
        $region81: #{prefix_forward.1} parent=31 // pred_check
          %p625 = pneg %p372
        $region82: #{prefix_forward.1} parent=31 // pred_check_branch
          %627 = sbr.rel (%p625) target = $region84
        $region83: #{prefix_forward.1} parent=31 // pred_region
          %p628 = scmp.lt.s32.totalorder %s36, 1
          %s629 = scalar_select %p628, %s36, 1
          %s630 = smul.addr %s629, 16
          %s631 = smul.addr %s630, 4
          %s632 = scalar_lea.vmem %s13, %s631
        $region84: #{prefix_forward.1} parent=31 // pred_fallthru
          _
        // Predicated region
        $region85: #{prefix_forward.1} parent=31 // pred_check
          %p633 = pneg %p398
        $region86: #{prefix_forward.1} parent=31 // pred_check_branch
          %635 = sbr.rel (%p633) target = $region88
        $region87: #{prefix_forward.1} parent=31 // pred_region
          %p636 = scmp.lt.s32.totalorder %s36, 1
          %s637 = scalar_select %p636, %s36, 1
          %s638 = scalar_lea.vmem %s14, %s637
        $region88: #{prefix_forward.1} parent=31 // pred_fallthru
          _
      $region32: #{prefix_forward.1} parent=5 // pred_fallthru
        _
      %p639 = scmp.le.s32.totalorder 1, %s28
      %p640 = scmp.lt.s32.totalorder %s28, 5
      %p641 = pnand %p639, %p640
      %p642 = pneg %p641
      // Predicated region
      $region89: #{prefix_forward.1} parent=5 // pred_check
        _
      $region90: #{prefix_forward.1} parent=5 // pred_check_branch
        %644 = sbr.rel (%p641) target = $region92
      $region91: #{prefix_forward.1} parent=5 // pred_region
        %s645 = ssub.s32 %s28, 1
        %p646 = scmp.lt.s32.totalorder %s38, 1
        %s647 = scalar_select %p646, %s38, 1
        %s648 = scalar_lea.vmem %s1, %s647
        %p649 = pneg %p66
        %p650 = pneg %p63
        %p651 = scmp.lt.s32.totalorder %s38, 1
        %s652 = scalar_select %p651, %s38, 1
        %s653 = scalar_lea.vmem %s2, %s652
        %p654 = pneg %p92
        %p655 = pneg %p89
        %p656 = scmp.lt.s32.totalorder %s38, 1
        %s657 = scalar_select %p656, %s38, 1
        %s658 = smul.addr %s657, 4
        %s659 = smul.addr %s658, 4
        %s660 = scalar_lea.vmem %s3, %s659
        %p661 = pneg %p118
        %p662 = pneg %p115
        %p663 = scmp.lt.s32.totalorder %s38, 1
        %s664 = scalar_select %p663, %s38, 1
        %s665 = scalar_lea.vmem %s4, %s664
        %p666 = pneg %p144
        %p667 = pneg %p141
        %p668 = scmp.lt.s32.totalorder %s38, 1
        %s669 = scalar_select %p668, %s38, 1
        %s670 = smul.addr %s669, 2
        %s671 = smul.addr %s670, 4
        %s672 = scalar_lea.vmem %s5, %s671
        %p673 = pneg %p170
        %p674 = pneg %p167
        %p675 = scmp.lt.s32.totalorder %s38, 1
        %s676 = scalar_select %p675, %s38, 1
        %s677 = scalar_lea.vmem %s6, %s676
        %p678 = pneg %p196
        %p679 = pneg %p193
        %p680 = scmp.lt.s32.totalorder %s38, 1
        %s681 = scalar_select %p680, %s38, 1
        %s682 = smul.addr %s681, 4
        %s683 = smul.addr %s682, 4
        %s684 = scalar_lea.vmem %s7, %s683
        %p685 = pneg %p222
        %p686 = pneg %p219
        %p687 = scmp.lt.s32.totalorder %s38, 1
        %s688 = scalar_select %p687, %s38, 1
        %s689 = scalar_lea.vmem %s8, %s688
        %p690 = pneg %p248
        %p691 = pneg %p245
        %p692 = scmp.lt.s32.totalorder %s38, 1
        %s693 = scalar_select %p692, %s38, 1
        %s694 = scalar_lea.vmem %s9, %s693
        %p695 = pneg %p274
        %p696 = pneg %p271
        %p697 = scmp.lt.s32.totalorder %s38, 1
        %s698 = scalar_select %p697, %s38, 1
        %s699 = scalar_lea.vmem %s10, %s698
        %p700 = pneg %p300
        %p701 = pneg %p297
        %p702 = scmp.lt.s32.totalorder %s38, 1
        %s703 = scalar_select %p702, %s38, 1
        %s704 = smul.addr %s703, 4
        %s705 = smul.addr %s704, 4
        %s706 = scalar_lea.vmem %s11, %s705
        %p707 = pneg %p326
        %p708 = pneg %p323
        %p709 = scmp.lt.s32.totalorder %s38, 1
        %s710 = scalar_select %p709, %s38, 1
        %s711 = scalar_lea.vmem %s12, %s710
        %p712 = pneg %p352
        %p713 = pneg %p349
        %p714 = scmp.lt.s32.totalorder %s38, 1
        %s715 = scalar_select %p714, %s38, 1
        %s716 = smul.addr %s715, 16
        %s717 = smul.addr %s716, 4
        %s718 = scalar_lea.vmem %s13, %s717
        %p719 = pneg %p378
        %p720 = pneg %p375
        %p721 = scmp.lt.s32.totalorder %s38, 1
        %s722 = scalar_select %p721, %s38, 1
        %s723 = scalar_lea.vmem %s14, %s722
        %p724 = pneg %p404
        %p725 = pneg %p401
        %p726 = pneg %p425
        %p727 = pneg %p422
        %p728 = pneg %p446
        %p729 = pneg %p443
        %p730 = pneg %p467
        %p731 = pneg %p464
        %p732 = pneg %p488
        %p733 = pneg %p485
        %p734 = pneg %p514
        %p735 = pneg %p511
        %s736 = sand.u32 %s501, 1
        %s737 = scalar_lea.sflag [#allocation5], %s736
        %s738 = sand.u32 %s501, 1
        %s739 = scalar_lea.vmem [#allocation4], %s738
        %p740 = scmp.lt.s32.totalorder %s38, 1
        %s741 = scalar_select %p740, %s38, 1
        %s742 = scalar_lea.vmem %s1, %s741
        %p743 = scmp.lt.s32.totalorder %s38, 1
        %s744 = scalar_select %p743, %s38, 1
        %s745 = scalar_lea.vmem %s2, %s744
        %p746 = scmp.lt.s32.totalorder %s38, 1
        %s747 = scalar_select %p746, %s38, 1
        %s748 = smul.addr %s747, 4
        %s749 = smul.addr %s748, 4
        %s750 = scalar_lea.vmem %s3, %s749
        %p751 = scmp.lt.s32.totalorder %s38, 1
        %s752 = scalar_select %p751, %s38, 1
        %s753 = scalar_lea.vmem %s4, %s752
        %p754 = scmp.lt.s32.totalorder %s38, 1
        %s755 = scalar_select %p754, %s38, 1
        %s756 = smul.addr %s755, 2
        %s757 = smul.addr %s756, 4
        %s758 = scalar_lea.vmem %s5, %s757
        %p759 = scmp.lt.s32.totalorder %s38, 1
        %s760 = scalar_select %p759, %s38, 1
        %s761 = scalar_lea.vmem %s6, %s760
        %p762 = scmp.lt.s32.totalorder %s38, 1
        %s763 = scalar_select %p762, %s38, 1
        %s764 = smul.addr %s763, 4
        %s765 = smul.addr %s764, 4
        %s766 = scalar_lea.vmem %s7, %s765
        %p767 = scmp.lt.s32.totalorder %s38, 1
        %s768 = scalar_select %p767, %s38, 1
        %s769 = scalar_lea.vmem %s8, %s768
        %p770 = scmp.lt.s32.totalorder %s38, 1
        %s771 = scalar_select %p770, %s38, 1
        %s772 = scalar_lea.vmem %s9, %s771
        %p773 = scmp.lt.s32.totalorder %s38, 1
        %s774 = scalar_select %p773, %s38, 1
        %s775 = scalar_lea.vmem %s10, %s774
        %p776 = scmp.lt.s32.totalorder %s38, 1
        %s777 = scalar_select %p776, %s38, 1
        %s778 = smul.addr %s777, 4
        %s779 = smul.addr %s778, 4
        %s780 = scalar_lea.vmem %s11, %s779
        %p781 = scmp.lt.s32.totalorder %s38, 1
        %s782 = scalar_select %p781, %s38, 1
        %s783 = scalar_lea.vmem %s12, %s782
        %p784 = scmp.lt.s32.totalorder %s38, 1
        %s785 = scalar_select %p784, %s38, 1
        %s786 = smul.addr %s785, 16
        %s787 = smul.addr %s786, 4
        %s788 = scalar_lea.vmem %s13, %s787
        %p789 = scmp.lt.s32.totalorder %s38, 1
        %s790 = scalar_select %p789, %s38, 1
        %s791 = scalar_lea.vmem %s14, %s790
        %p793 = scmp.eq.s32.totalorder %s38, 0
        // Predicated region
        $region93: #{prefix_forward.1} parent=91 // pred_check
          %p794 = pneg %p793
        $region94: #{prefix_forward.1} parent=91 // pred_check_branch
          %796 = sbr.rel (%p794) target = $region96
        $region95: #{prefix_forward.1} parent=91 // pred_region
          %s797 = smul.u32 %s37, 24
          %s798 = scalar_lea.vmem %s0, %s797
          // Predicated region
          $region97: #{prefix_forward.1} parent=95 // pred_check
            _
          $region98: #{prefix_forward.1} parent=95 // pred_check_branch
            %800 = sbr.rel (0) target = $region100
          $region99: #{prefix_forward.1} parent=95 // pred_region
            loop: start=0, step=1, limit=1
            $region101: #{prefix_forward.1} parent=99 // loop_pre_header
              _
            $region102: #{prefix_forward.1} parent=99 // loop_header
              %s802 = sphi 0, %s806
              %p803 = scmp.ge.s32.totalorder %s802, 1
              %s807 = sphi %s798, %s798
              %s808 = sphi [#allocation2], [#allocation2]
            $region103: #{prefix_forward.1} parent=99 // loop_header_branch
              %805 = sbr.rel (%p803) target = $region107
            $region104: #{prefix_forward.1} parent=99 // loop_body
              %v809 = vld [vmem:[%s807] sm:$0xff]
              %810 = vst [vmem:[%s808] sm:$0xff] %v809
              %v811 = vld [vmem:[%s807 + $0x8] sm:$0xff]
              %812 = vst [vmem:[%s808 + $0x8] sm:$0xff] %v811
              %v813 = vld [vmem:[%s807 + $0x10] sm:$0xff]
              %814 = vst [vmem:[%s808 + $0x10] sm:$0xff] %v813
            $region105: #{prefix_forward.1} parent=99 // loop_footer
              %s806 = sadd.s32 1, %s802
            $region106: #{prefix_forward.1} parent=99 // loop_footer_branch
              %801 = sbr.rel target = $region102
            $region107: #{prefix_forward.1} parent=99 // loop_exit
              _
          $region100: #{prefix_forward.1} parent=95 // pred_fallthru
            _
          // Predicated region
          $region108: #{prefix_forward.1} parent=95 // pred_check
            _
          $region109: #{prefix_forward.1} parent=95 // pred_check_branch
            %816 = sbr.rel target = $region111
          $region110: #{prefix_forward.1} parent=95 // pred_region
            _
          $region111: #{prefix_forward.1} parent=95 // pred_fallthru
            _
          // Predicated region
          $region112: #{prefix_forward.1} parent=95 // pred_check
            _
          $region113: #{prefix_forward.1} parent=95 // pred_check_branch
            %819 = sbr.rel (0) target = $region115
          $region114: #{prefix_forward.1} parent=95 // pred_region
            %820 = vsyncadd [#allocation3], 384
          $region115: #{prefix_forward.1} parent=95 // pred_fallthru
            _
          %s821 = smul.u32 24, 1
          %s822 = sshll.u32 %s821, 4
          %823 = dma.done [#allocation3], %s822
        $region96: #{prefix_forward.1} parent=91 // pred_fallthru
          _
        %v824 = vld [vmem:[#allocation2] sm:$0xff]
        %v825 = vld [vmem:[#allocation2 + $0x8] sm:$0xff]
        %v826 = vld [vmem:[#allocation2 + $0x10] sm:$0xff]
        %v827 = vlaneseq
        %v828 = vshrl.u32 %v827, 7
        %v829 = vadd.s32 %v828, 8
        %v830 = vadd.s32 %v828, 16
        %v831 = vlaneseq
        %v832 = vand.u32 %v831, 127
        %vm833 = vcmp.ge.s32.totalorder %v828, 0
        %vm834 = vcmp.ge.s32.totalorder %v829, 0
        %vm835 = vcmp.ge.s32.totalorder %v830, 0
        %vm836 = vcmp.lt.s32.totalorder %v828, 24
        %vm837 = vcmp.lt.s32.totalorder %v829, 24
        %vm838 = vcmp.lt.s32.totalorder %v830, 24
        %vm839 = vmand %vm833, %vm836
        %vm840 = vmand %vm834, %vm837
        %vm841 = vmand %vm835, %vm838
        %vm842 = vcmp.ge.s32.totalorder %v832, 0
        %vm843 = vcmp.lt.s32.totalorder %v832, 17
        %vm844 = vmand %vm842, %vm843
        %vm845 = vmand %vm839, %vm844
        %vm846 = vmand %vm840, %vm844
        %vm847 = vmand %vm841, %vm844
        %v848 = vsel %vm845, 0.0, -1e+30
        %v849 = vsel %vm846, 0.0, -1e+30
        %v850 = vsel %vm847, 0.0, -1e+30
        %v851 = vld [vmem:[%s742] sm:$0x1]
        %v852 = vld [vmem:[%s745] sm:$0x1]
        %vm853 = vcmask 261120
        %v854 = vsel %vm853, %v824, 0.0
        %855 = vadd.xlane.f32.xlu0 %v854
        %v856 = vpop.xlane.xlu0 %855
        %v857 = vsel %vm853, %v825, 0.0
        %858 = vadd.xlane.f32.xlu0 %v857
        %v859 = vpop.xlane.xlu0 %858
        %v860 = vsel %vm853, %v826, 0.0
        %861 = vadd.xlane.f32.xlu0 %v860
        %v862 = vpop.xlane.xlu0 %861
        %v863 = vrcp.pop 32.0
        %v864 = vmul.f32 32.0, %v863
        %v865 = vsub.f32 1.0, %v864
        %v866 = vmul.f32 %v863, %v865
        %v867 = vadd.f32 %v863, %v866
        %vm868 = vweird.f32 %v863
        %v869 = vsel %vm868, %v863, %v867
        %v870 = vmul.f32 %v856, %v869
        %v871 = vmul.f32 %v859, %v869
        %v872 = vmul.f32 %v862, %v869
        %v873 = vsub.f32 %v824, %v870
        %v874 = vsub.f32 %v825, %v871
        %v875 = vsub.f32 %v826, %v872
        %v876 = vmul.f32 %v873, %v873
        %v877 = vmul.f32 %v874, %v874
        %v878 = vmul.f32 %v875, %v875
        %v879 = vsel %vm853, %v876, 0.0
        %880 = vadd.xlane.f32.xlu0 %v879
        %v881 = vpop.xlane.xlu0 %880
        %v882 = vsel %vm853, %v877, 0.0
        %883 = vadd.xlane.f32.xlu0 %v882
        %v884 = vpop.xlane.xlu0 %883
        %v885 = vsel %vm853, %v878, 0.0
        %886 = vadd.xlane.f32.xlu0 %v885
        %v887 = vpop.xlane.xlu0 %886
        %v888 = vmul.f32 %v881, %v869
        %v889 = vmul.f32 %v884, %v869
        %v890 = vmul.f32 %v887, %v869
        %v891 = vadd.f32 %v888, 1e-06
        %v892 = vadd.f32 %v889, 1e-06
        %v893 = vadd.f32 %v890, 1e-06
        %v894 = vrsqrt.pop %v891
        %v895 = vmul.f32 %v894, %v891
        %v896 = vmul.f32 %v895, %v894
        %v897 = vmul.f32 0.5, %v896
        %v898 = vsub.f32 1.5, %v897
        %v899 = vmul.f32 %v894, %v898
        %vm900 = vweird.f32 %v891
        %vm901 = vweird.f32 %v894
        %vm902 = vmor %vm900, %vm901
        %v903 = vsel %vm902, %v894, %v899
        %v904 = vrsqrt.pop %v892
        %v905 = vmul.f32 %v904, %v892
        %v906 = vmul.f32 %v905, %v904
        %v907 = vmul.f32 0.5, %v906
        %v908 = vsub.f32 1.5, %v907
        %v909 = vmul.f32 %v904, %v908
        %vm910 = vweird.f32 %v892
        %vm911 = vweird.f32 %v904
        %vm912 = vmor %vm910, %vm911
        %v913 = vsel %vm912, %v904, %v909
        %v914 = vrsqrt.pop %v893
        %v915 = vmul.f32 %v914, %v893
        %v916 = vmul.f32 %v915, %v914
        %v917 = vmul.f32 0.5, %v916
        %v918 = vsub.f32 1.5, %v917
        %v919 = vmul.f32 %v914, %v918
        %vm920 = vweird.f32 %v893
        %vm921 = vweird.f32 %v914
        %vm922 = vmor %vm920, %vm921
        %v923 = vsel %vm922, %v914, %v919
        %v924 = vmul.f32 %v873, %v903
        %v925 = vmul.f32 %v874, %v913
        %v926 = vmul.f32 %v875, %v923
        %v928 = vperm.slane %v851, 0
        %v930 = vmul.f32 %v924, %v928
        %v931 = vmul.f32 %v925, %v928
        %v932 = vmul.f32 %v926, %v928
        %v934 = vperm.slane %v852, 0
        %v936 = vadd.f32 %v930, %v934
        %v937 = vadd.f32 %v931, %v934
        %v938 = vadd.f32 %v932, %v934
        %v939 = vpack.c.bf16 %v937, %v936
        %v940 = vpack.c.bf16 %v938, %v938
        %v941 = vld [vmem:[%s750] sm:$0xf]
        %v942 = vld [vmem:[%s750 + $0x4] sm:$0xf]
        %v943 = vld [vmem:[%s750 + $0x8] sm:$0xf]
        %v944 = vld [vmem:[%s750 + $0xc] sm:$0xf]
        %v945 = vld [vmem:[%s753] sm:$0x1]
        %v947 = vperm.slane %v945, 0
        %v953 = vunpack.c.l.b16 %v941
        %v954 = vunpack.c.l.b16 %v942
        %v955 = vunpack.c.l.b16 %v943
        %v956 = vunpack.c.l.b16 %v944
        %v957 = vpack.c.b16 %v954, %v953
        %v958 = vpack.c.b16 %v956, %v955
        %v962 = vsel %vm853, %v939, 0
        %v965 = vsel %vm853, %v940, 0
        %967 = vmatpush.bf16.msra.mxu0 0
        %968 = vmatpush.bf16.msra.mxu0 0
        %969 = vmatpush.bf16.msra.mxu0 0
        %970 = vmatpush.bf16.msra.mxu0 0
        %971 = vmatpush.bf16.msra.mxu0 0
        %972 = vmatpush.bf16.msra.mxu0 0
        %973 = vmatpush.bf16.msra.mxu0 %v958
        %974 = vmatpush.bf16.msra.mxu0 %v957
        %975 = vmatmul.bf16.gmra.mxu0 %v962
        %v976 = vpop.f32.mrf.mxu0
        %v977 = vadd.f32 %v947, %v976
        %v978 = vpop.f32.mrf.mxu0
        %v979 = vadd.f32 %v947, %v978
        %980 = vmatmul.bf16.gmra.mxu0 %v965
        %v981 = vpop.f32.mrf.mxu0
        %v982 = vadd.f32 %v947, %v981
        %v983 = vpop.f32.mrf.mxu0
        %984 = vdwg.mxu0
        %v985 = vtanh.pop %v977
        %v986 = vtanh.pop %v979
        %v987 = vtanh.pop %v982
        %v988 = vpack.c.bf16 %v986, %v985
        %v989 = vpack.c.bf16 %v987, %v987
        %v990 = vld [vmem:[%s758] sm:$0xf]
        %v991 = vld [vmem:[%s758 + $0x4] sm:$0xf]
        %v992 = vld [vmem:[%s761] sm:$0x1]
        %v994 = vperm.slane %v992, 0
        %998 = vrot.lane.b32.xlu0 %v988, 32
        %v999 = vpop.permute.xlu0 %998
        %1000 = vrot.lane.b32.xlu0 %v989, 32
        %v1001 = vpop.permute.xlu0 %1000
        %v1004 = vunpack.c.l.b16 %v990
        %v1005 = vunpack.c.l.b16 %v991
        %v1006 = vpack.c.b16 %v1005, %v1004
        %vm1008 = vcmask 130048
        %v1010 = vsel %vm1008, %v999, 0
        %v1013 = vsel %vm1008, %v1001, 0
        %1015 = vmatpush.bf16.msra.mxu0 0
        %1016 = vmatpush.bf16.msra.mxu0 0
        %1017 = vmatpush.bf16.msra.mxu0 0
        %1018 = vmatpush.bf16.msra.mxu0 0
        %1019 = vmatpush.bf16.msra.mxu0 0
        %1020 = vmatpush.bf16.msra.mxu0 0
        %1021 = vmatpush.bf16.msra.mxu0 0
        %1022 = vmatpush.bf16.msra.mxu0 %v1006
        %1023 = vmatmul.bf16.gmra.mxu0 %v1010
        %v1024 = vpop.f32.mrf.mxu0
        %v1025 = vadd.f32 %v994, %v1024
        %v1026 = vpop.f32.mrf.mxu0
        %v1027 = vadd.f32 %v994, %v1026
        %1028 = vmatmul.bf16.gmra.mxu0 %v1013
        %v1029 = vpop.f32.mrf.mxu0
        %v1030 = vadd.f32 %v994, %v1029
        %v1031 = vpop.f32.mrf.mxu0
        %1032 = vdwg.mxu0
        %v1033 = vmul.f32 %v977, 0.35355338
        %v1034 = vmul.f32 %v979, 0.35355338
        %v1035 = vmul.f32 %v982, 0.35355338
        %v1036 = vmul.f32 %v1025, 0.8
        %v1037 = vmul.f32 %v1027, 0.8
        %v1038 = vmul.f32 %v1030, 0.8
        %1042 = vrot.lane.b32.xlu0 %v1036, 32
        %v1043 = vpop.permute.xlu0 %1042
        %1044 = vrot.lane.b32.xlu0 %v1037, 32
        %v1045 = vpop.permute.xlu0 %1044
        %1046 = vrot.lane.b32.xlu0 %v1038, 32
        %v1047 = vpop.permute.xlu0 %1046
        %v1051 = vadd.f32 %v977, %v1043
        %v1052 = vadd.f32 %v979, %v1045
        %v1053 = vadd.f32 %v982, %v1047
        %1057 = vrot.lane.b32.xlu0 %v1051, 96
        %v1058 = vpop.permute.xlu0 %1057
        %1059 = vrot.lane.b32.xlu0 %v1052, 96
        %v1060 = vpop.permute.xlu0 %1059
        %1061 = vrot.lane.b32.xlu0 %v1053, 96
        %v1062 = vpop.permute.xlu0 %1061
        %vm1063 = vcmask 64512
        %v1065 = vsel %vm1063, %v1033, 0
        %v1068 = vsel %vm1063, %v1034, 0
        %v1071 = vsel %vm1063, %v1035, 0
        %v1073 = vsel %vm1063, %v1058, 0
        %v1075 = vsel %vm1063, %v1060, 0
        %v1077 = vsel %vm1063, %v1062, 0
        %1079 = vmatpush.xpose.msra.mxu0 0.0
        %1080 = vmatpush.xpose.msra.mxu0 0.0
        %1081 = vmatpush.xpose.msra.mxu0 0.0
        %1082 = vmatpush.xpose.msra.mxu0 0.0
        %1083 = vmatpush.xpose.msra.mxu0 0.0
        %1084 = vmatpush.xpose.msra.mxu0 0.0
        %1085 = vmatpush.xpose.msra.mxu0 0.0
        %1086 = vmatpush.xpose.msra.mxu0 0.0
        %1087 = vmatpush.xpose.msra.mxu0 0.0
        %1088 = vmatpush.xpose.msra.mxu0 0.0
        %1089 = vmatpush.xpose.msra.mxu0 0.0
        %1090 = vmatpush.xpose.msra.mxu0 0.0
        %1091 = vmatpush.xpose.msra.mxu0 0.0
        %1092 = vmatpush.xpose.msra.mxu0 %v1077
        %1093 = vmatpush.xpose.msra.mxu0 %v1075
        %1094 = vmatpush.xpose.msra.mxu0 %v1073
        %1095 = vmatmul.f32.gmra.mxu0 %v1065
        %v1096 = vpop.f32.mrf.mxu0
        %v1097 = vadd.f32 %v848, %v1096
        %1098 = vmatmul.f32.gmra.mxu0 %v1068
        %v1099 = vpop.f32.mrf.mxu0
        %v1100 = vadd.f32 %v849, %v1099
        %1101 = vmatmul.f32.gmra.mxu0 %v1071
        %v1102 = vpop.f32.mrf.mxu0
        %v1103 = vadd.f32 %v850, %v1102
        %1104 = vdwg.mxu0
        %vm1105 = vcmask 195584
        %v1106 = vsel %vm1105, %v1097, -inf
        %1107 = vmax.xlane.f32.xlu0 %v1106
        %v1108 = vpop.xlane.xlu0 %1107
        %v1109 = vsel %vm1105, %v1100, -inf
        %1110 = vmax.xlane.f32.xlu0 %v1109
        %v1111 = vpop.xlane.xlu0 %1110
        %v1112 = vsel %vm1105, %v1103, -inf
        %1113 = vmax.xlane.f32.xlu0 %v1112
        %v1114 = vpop.xlane.xlu0 %1113
        %v1115 = vsub.f32 %v1097, %v1108
        %v1116 = vsub.f32 %v1100, %v1111
        %v1117 = vsub.f32 %v1103, %v1114
        %v1118 = vmul.f32 %v1115, 1.442695
        %v1119 = vpow.pop %v1118
        %v1120 = vmul.f32 %v1116, 1.442695
        %v1121 = vpow.pop %v1120
        %v1122 = vmul.f32 %v1117, 1.442695
        %v1123 = vpow.pop %v1122
        %v1124 = vsel %vm1105, %v1119, 0.0
        %1125 = vadd.xlane.f32.xlu0 %v1124
        %v1126 = vpop.xlane.xlu0 %1125
        %v1127 = vsel %vm1105, %v1121, 0.0
        %1128 = vadd.xlane.f32.xlu0 %v1127
        %v1129 = vpop.xlane.xlu0 %1128
        %v1130 = vsel %vm1105, %v1123, 0.0
        %1131 = vadd.xlane.f32.xlu0 %v1130
        %v1132 = vpop.xlane.xlu0 %1131
        %v1133 = vrcp.pop %v1126
        %v1134 = vrcp.pop %v1129
        %v1135 = vrcp.pop %v1132
        %v1136 = vmul.f32 %v1119, %v1133
        %v1137 = vmul.f32 %v1121, %v1134
        %v1138 = vmul.f32 %v1123, %v1135
        %1139 = vrot.lane.b32.xlu0 %v1051, 64
        %v1140 = vpop.permute.xlu0 %1139
        %1141 = vrot.lane.b32.xlu0 %v1052, 64
        %v1142 = vpop.permute.xlu0 %1141
        %1143 = vrot.lane.b32.xlu0 %v1053, 64
        %v1144 = vpop.permute.xlu0 %1143
        %v1149 = vsel %vm1105, %v1136, 0
        %v1152 = vsel %vm1105, %v1137, 0
        %v1155 = vsel %vm1105, %v1138, 0
        %1157 = vmatpush.msra.mxu0 0.0
        %1158 = vmatpush.msra.mxu0 0.0
        %1159 = vmatpush.msra.mxu0 0.0
        %1160 = vmatpush.msra.mxu0 0.0
        %1161 = vmatpush.msra.mxu0 0.0
        %1162 = vmatpush.msra.mxu0 0.0
        %1163 = vmatpush.msra.mxu0 0.0
        %1164 = vmatpush.msra.mxu0 0.0
        %1165 = vmatpush.msra.mxu0 0.0
        %1166 = vmatpush.msra.mxu0 0.0
        %1167 = vmatpush.msra.mxu0 0.0
        %1168 = vmatpush.msra.mxu0 0.0
        %1169 = vmatpush.msra.mxu0 0.0
        %1170 = vmatpush.msra.mxu0 %v1144
        %1171 = vmatpush.msra.mxu0 %v1142
        %1172 = vmatpush.msra.mxu0 %v1140
        %1173 = vmatmul.f32.gmra.mxu0 %v1149
        %v1174 = vpop.f32.mrf.mxu0
        %v1175 = vadd.f32 0.0, %v1174
        %1176 = vmatmul.f32.gmra.mxu0 %v1152
        %v1177 = vpop.f32.mrf.mxu0
        %v1178 = vadd.f32 0.0, %v1177
        %1179 = vmatmul.f32.gmra.mxu0 %v1155
        %v1180 = vpop.f32.mrf.mxu0
        %v1181 = vadd.f32 0.0, %v1180
        %1182 = vdwg.mxu0
        %1183 = vrot.lane.b32.xlu0 %v1033, 120
        %v1184 = vpop.permute.xlu0 %1183
        %1185 = vrot.lane.b32.xlu0 %v1034, 120
        %v1186 = vpop.permute.xlu0 %1185
        %1187 = vrot.lane.b32.xlu0 %v1035, 120
        %v1188 = vpop.permute.xlu0 %1187
        %1189 = vrot.lane.b32.xlu0 %v1051, 88
        %v1190 = vpop.permute.xlu0 %1189
        %1191 = vrot.lane.b32.xlu0 %v1052, 88
        %v1192 = vpop.permute.xlu0 %1191
        %1193 = vrot.lane.b32.xlu0 %v1053, 88
        %v1194 = vpop.permute.xlu0 %1193
        %v1195 = vsel %vm1063, %v1184, 0
        %v1197 = vsel %vm1063, %v1186, 0
        %v1199 = vsel %vm1063, %v1188, 0
        %v1201 = vsel %vm1063, %v1190, 0
        %v1203 = vsel %vm1063, %v1192, 0
        %v1205 = vsel %vm1063, %v1194, 0
        %1207 = vmatpush.xpose.msra.mxu0 0.0
        %1208 = vmatpush.xpose.msra.mxu0 0.0
        %1209 = vmatpush.xpose.msra.mxu0 0.0
        %1210 = vmatpush.xpose.msra.mxu0 0.0
        %1211 = vmatpush.xpose.msra.mxu0 0.0
        %1212 = vmatpush.xpose.msra.mxu0 0.0
        %1213 = vmatpush.xpose.msra.mxu0 0.0
        %1214 = vmatpush.xpose.msra.mxu0 0.0
        %1215 = vmatpush.xpose.msra.mxu0 0.0
        %1216 = vmatpush.xpose.msra.mxu0 0.0
        %1217 = vmatpush.xpose.msra.mxu0 0.0
        %1218 = vmatpush.xpose.msra.mxu0 0.0
        %1219 = vmatpush.xpose.msra.mxu0 0.0
        %1220 = vmatpush.xpose.msra.mxu0 %v1205
        %1221 = vmatpush.xpose.msra.mxu0 %v1203
        %1222 = vmatpush.xpose.msra.mxu0 %v1201
        %1223 = vmatmul.f32.gmra.mxu0 %v1195
        %v1224 = vpop.f32.mrf.mxu0
        %v1225 = vadd.f32 %v848, %v1224
        %1226 = vmatmul.f32.gmra.mxu0 %v1197
        %v1227 = vpop.f32.mrf.mxu0
        %v1228 = vadd.f32 %v849, %v1227
        %1229 = vmatmul.f32.gmra.mxu0 %v1199
        %v1230 = vpop.f32.mrf.mxu0
        %v1231 = vadd.f32 %v850, %v1230
        %1232 = vdwg.mxu0
        %v1233 = vsel %vm1105, %v1225, -inf
        %1234 = vmax.xlane.f32.xlu0 %v1233
        %v1235 = vpop.xlane.xlu0 %1234
        %v1236 = vsel %vm1105, %v1228, -inf
        %1237 = vmax.xlane.f32.xlu0 %v1236
        %v1238 = vpop.xlane.xlu0 %1237
        %v1239 = vsel %vm1105, %v1231, -inf
        %1240 = vmax.xlane.f32.xlu0 %v1239
        %v1241 = vpop.xlane.xlu0 %1240
        %v1242 = vsub.f32 %v1225, %v1235
        %v1243 = vsub.f32 %v1228, %v1238
        %v1244 = vsub.f32 %v1231, %v1241
        %v1245 = vmul.f32 %v1242, 1.442695
        %v1246 = vpow.pop %v1245
        %v1247 = vmul.f32 %v1243, 1.442695
        %v1248 = vpow.pop %v1247
        %v1249 = vmul.f32 %v1244, 1.442695
        %v1250 = vpow.pop %v1249
        %v1251 = vsel %vm1105, %v1246, 0.0
        %1252 = vadd.xlane.f32.xlu0 %v1251
        %v1253 = vpop.xlane.xlu0 %1252
        %v1254 = vsel %vm1105, %v1248, 0.0
        %1255 = vadd.xlane.f32.xlu0 %v1254
        %v1256 = vpop.xlane.xlu0 %1255
        %v1257 = vsel %vm1105, %v1250, 0.0
        %1258 = vadd.xlane.f32.xlu0 %v1257
        %v1259 = vpop.xlane.xlu0 %1258
        %v1260 = vrcp.pop %v1253
        %v1261 = vrcp.pop %v1256
        %v1262 = vrcp.pop %v1259
        %v1263 = vmul.f32 %v1246, %v1260
        %v1264 = vmul.f32 %v1248, %v1261
        %v1265 = vmul.f32 %v1250, %v1262
        %1266 = vrot.lane.b32.xlu0 %v1051, 56
        %v1267 = vpop.permute.xlu0 %1266
        %1268 = vrot.lane.b32.xlu0 %v1052, 56
        %v1269 = vpop.permute.xlu0 %1268
        %1270 = vrot.lane.b32.xlu0 %v1053, 56
        %v1271 = vpop.permute.xlu0 %1270
        %v1276 = vsel %vm1105, %v1263, 0
        %v1279 = vsel %vm1105, %v1264, 0
        %v1282 = vsel %vm1105, %v1265, 0
        %1284 = vmatpush.msra.mxu0 0.0
        %1285 = vmatpush.msra.mxu0 0.0
        %1286 = vmatpush.msra.mxu0 0.0
        %1287 = vmatpush.msra.mxu0 0.0
        %1288 = vmatpush.msra.mxu0 0.0
        %1289 = vmatpush.msra.mxu0 0.0
        %1290 = vmatpush.msra.mxu0 0.0
        %1291 = vmatpush.msra.mxu0 0.0
        %1292 = vmatpush.msra.mxu0 0.0
        %1293 = vmatpush.msra.mxu0 0.0
        %1294 = vmatpush.msra.mxu0 0.0
        %1295 = vmatpush.msra.mxu0 0.0
        %1296 = vmatpush.msra.mxu0 0.0
        %1297 = vmatpush.msra.mxu0 %v1271
        %1298 = vmatpush.msra.mxu0 %v1269
        %1299 = vmatpush.msra.mxu0 %v1267
        %1300 = vmatmul.f32.gmra.mxu0 %v1276
        %v1301 = vpop.f32.mrf.mxu0
        %v1302 = vadd.f32 0.0, %v1301
        %1303 = vmatmul.f32.gmra.mxu0 %v1279
        %v1304 = vpop.f32.mrf.mxu0
        %v1305 = vadd.f32 0.0, %v1304
        %1306 = vmatmul.f32.gmra.mxu0 %v1282
        %v1307 = vpop.f32.mrf.mxu0
        %v1308 = vadd.f32 0.0, %v1307
        %1309 = vdwg.mxu0
        %1310 = vrot.lane.b32.xlu0 %v1033, 112
        %v1311 = vpop.permute.xlu0 %1310
        %1312 = vrot.lane.b32.xlu0 %v1034, 112
        %v1313 = vpop.permute.xlu0 %1312
        %1314 = vrot.lane.b32.xlu0 %v1035, 112
        %v1315 = vpop.permute.xlu0 %1314
        %1316 = vrot.lane.b32.xlu0 %v1051, 80
        %v1317 = vpop.permute.xlu0 %1316
        %1318 = vrot.lane.b32.xlu0 %v1052, 80
        %v1319 = vpop.permute.xlu0 %1318
        %1320 = vrot.lane.b32.xlu0 %v1053, 80
        %v1321 = vpop.permute.xlu0 %1320
        %v1322 = vsel %vm1063, %v1311, 0
        %v1324 = vsel %vm1063, %v1313, 0
        %v1326 = vsel %vm1063, %v1315, 0
        %v1328 = vsel %vm1063, %v1317, 0
        %v1330 = vsel %vm1063, %v1319, 0
        %v1332 = vsel %vm1063, %v1321, 0
        %1334 = vmatpush.xpose.msra.mxu0 0.0
        %1335 = vmatpush.xpose.msra.mxu0 0.0
        %1336 = vmatpush.xpose.msra.mxu0 0.0
        %1337 = vmatpush.xpose.msra.mxu0 0.0
        %1338 = vmatpush.xpose.msra.mxu0 0.0
        %1339 = vmatpush.xpose.msra.mxu0 0.0
        %1340 = vmatpush.xpose.msra.mxu0 0.0
        %1341 = vmatpush.xpose.msra.mxu0 0.0
        %1342 = vmatpush.xpose.msra.mxu0 0.0
        %1343 = vmatpush.xpose.msra.mxu0 0.0
        %1344 = vmatpush.xpose.msra.mxu0 0.0
        %1345 = vmatpush.xpose.msra.mxu0 0.0
        %1346 = vmatpush.xpose.msra.mxu0 0.0
        %1347 = vmatpush.xpose.msra.mxu0 %v1332
        %1348 = vmatpush.xpose.msra.mxu0 %v1330
        %1349 = vmatpush.xpose.msra.mxu0 %v1328
        %1350 = vmatmul.f32.gmra.mxu0 %v1322
        %v1351 = vpop.f32.mrf.mxu0
        %v1352 = vadd.f32 %v848, %v1351
        %1353 = vmatmul.f32.gmra.mxu0 %v1324
        %v1354 = vpop.f32.mrf.mxu0
        %v1355 = vadd.f32 %v849, %v1354
        %1356 = vmatmul.f32.gmra.mxu0 %v1326
        %v1357 = vpop.f32.mrf.mxu0
        %v1358 = vadd.f32 %v850, %v1357
        %1359 = vdwg.mxu0
        %v1360 = vsel %vm1105, %v1352, -inf
        %1361 = vmax.xlane.f32.xlu0 %v1360
        %v1362 = vpop.xlane.xlu0 %1361
        %v1363 = vsel %vm1105, %v1355, -inf
        %1364 = vmax.xlane.f32.xlu0 %v1363
        %v1365 = vpop.xlane.xlu0 %1364
        %v1366 = vsel %vm1105, %v1358, -inf
        %1367 = vmax.xlane.f32.xlu0 %v1366
        %v1368 = vpop.xlane.xlu0 %1367
        %v1369 = vsub.f32 %v1352, %v1362
        %v1370 = vsub.f32 %v1355, %v1365
        %v1371 = vsub.f32 %v1358, %v1368
        %v1372 = vmul.f32 %v1369, 1.442695
        %v1373 = vpow.pop %v1372
        %v1374 = vmul.f32 %v1370, 1.442695
        %v1375 = vpow.pop %v1374
        %v1376 = vmul.f32 %v1371, 1.442695
        %v1377 = vpow.pop %v1376
        %v1378 = vsel %vm1105, %v1373, 0.0
        %1379 = vadd.xlane.f32.xlu0 %v1378
        %v1380 = vpop.xlane.xlu0 %1379
        %v1381 = vsel %vm1105, %v1375, 0.0
        %1382 = vadd.xlane.f32.xlu0 %v1381
        %v1383 = vpop.xlane.xlu0 %1382
        %v1384 = vsel %vm1105, %v1377, 0.0
        %1385 = vadd.xlane.f32.xlu0 %v1384
        %v1386 = vpop.xlane.xlu0 %1385
        %v1387 = vrcp.pop %v1380
        %v1388 = vrcp.pop %v1383
        %v1389 = vrcp.pop %v1386
        %v1390 = vmul.f32 %v1373, %v1387
        %v1391 = vmul.f32 %v1375, %v1388
        %v1392 = vmul.f32 %v1377, %v1389
        %1393 = vrot.lane.b32.xlu0 %v1051, 48
        %v1394 = vpop.permute.xlu0 %1393
        %1395 = vrot.lane.b32.xlu0 %v1052, 48
        %v1396 = vpop.permute.xlu0 %1395
        %1397 = vrot.lane.b32.xlu0 %v1053, 48
        %v1398 = vpop.permute.xlu0 %1397
        %v1403 = vsel %vm1105, %v1390, 0
        %v1406 = vsel %vm1105, %v1391, 0
        %v1409 = vsel %vm1105, %v1392, 0
        %1411 = vmatpush.msra.mxu0 0.0
        %1412 = vmatpush.msra.mxu0 0.0
        %1413 = vmatpush.msra.mxu0 0.0
        %1414 = vmatpush.msra.mxu0 0.0
        %1415 = vmatpush.msra.mxu0 0.0
        %1416 = vmatpush.msra.mxu0 0.0
        %1417 = vmatpush.msra.mxu0 0.0
        %1418 = vmatpush.msra.mxu0 0.0
        %1419 = vmatpush.msra.mxu0 0.0
        %1420 = vmatpush.msra.mxu0 0.0
        %1421 = vmatpush.msra.mxu0 0.0
        %1422 = vmatpush.msra.mxu0 0.0
        %1423 = vmatpush.msra.mxu0 0.0
        %1424 = vmatpush.msra.mxu0 %v1398
        %1425 = vmatpush.msra.mxu0 %v1396
        %1426 = vmatpush.msra.mxu0 %v1394
        %1427 = vmatmul.f32.gmra.mxu0 %v1403
        %v1428 = vpop.f32.mrf.mxu0
        %v1429 = vadd.f32 0.0, %v1428
        %1430 = vmatmul.f32.gmra.mxu0 %v1406
        %v1431 = vpop.f32.mrf.mxu0
        %v1432 = vadd.f32 0.0, %v1431
        %1433 = vmatmul.f32.gmra.mxu0 %v1409
        %v1434 = vpop.f32.mrf.mxu0
        %v1435 = vadd.f32 0.0, %v1434
        %1436 = vdwg.mxu0
        %1437 = vrot.lane.b32.xlu0 %v1033, 104
        %v1438 = vpop.permute.xlu0 %1437
        %1439 = vrot.lane.b32.xlu0 %v1034, 104
        %v1440 = vpop.permute.xlu0 %1439
        %1441 = vrot.lane.b32.xlu0 %v1035, 104
        %v1442 = vpop.permute.xlu0 %1441
        %1443 = vrot.lane.b32.xlu0 %v1051, 72
        %v1444 = vpop.permute.xlu0 %1443
        %1445 = vrot.lane.b32.xlu0 %v1052, 72
        %v1446 = vpop.permute.xlu0 %1445
        %1447 = vrot.lane.b32.xlu0 %v1053, 72
        %v1448 = vpop.permute.xlu0 %1447
        %v1449 = vsel %vm1063, %v1438, 0
        %v1451 = vsel %vm1063, %v1440, 0
        %v1453 = vsel %vm1063, %v1442, 0
        %v1455 = vsel %vm1063, %v1444, 0
        %v1457 = vsel %vm1063, %v1446, 0
        %v1459 = vsel %vm1063, %v1448, 0
        %1461 = vmatpush.xpose.msra.mxu0 0.0
        %1462 = vmatpush.xpose.msra.mxu0 0.0
        %1463 = vmatpush.xpose.msra.mxu0 0.0
        %1464 = vmatpush.xpose.msra.mxu0 0.0
        %1465 = vmatpush.xpose.msra.mxu0 0.0
        %1466 = vmatpush.xpose.msra.mxu0 0.0
        %1467 = vmatpush.xpose.msra.mxu0 0.0
        %1468 = vmatpush.xpose.msra.mxu0 0.0
        %1469 = vmatpush.xpose.msra.mxu0 0.0
        %1470 = vmatpush.xpose.msra.mxu0 0.0
        %1471 = vmatpush.xpose.msra.mxu0 0.0
        %1472 = vmatpush.xpose.msra.mxu0 0.0
        %1473 = vmatpush.xpose.msra.mxu0 0.0
        %1474 = vmatpush.xpose.msra.mxu0 %v1459
        %1475 = vmatpush.xpose.msra.mxu0 %v1457
        %1476 = vmatpush.xpose.msra.mxu0 %v1455
        %1477 = vmatmul.f32.gmra.mxu0 %v1449
        %v1478 = vpop.f32.mrf.mxu0
        %v1479 = vadd.f32 %v848, %v1478
        %1480 = vmatmul.f32.gmra.mxu0 %v1451
        %v1481 = vpop.f32.mrf.mxu0
        %v1482 = vadd.f32 %v849, %v1481
        %1483 = vmatmul.f32.gmra.mxu0 %v1453
        %v1484 = vpop.f32.mrf.mxu0
        %v1485 = vadd.f32 %v850, %v1484
        %1486 = vdwg.mxu0
        %v1487 = vsel %vm1105, %v1479, -inf
        %1488 = vmax.xlane.f32.xlu0 %v1487
        %v1489 = vpop.xlane.xlu0 %1488
        %v1490 = vsel %vm1105, %v1482, -inf
        %1491 = vmax.xlane.f32.xlu0 %v1490
        %v1492 = vpop.xlane.xlu0 %1491
        %v1493 = vsel %vm1105, %v1485, -inf
        %1494 = vmax.xlane.f32.xlu0 %v1493
        %v1495 = vpop.xlane.xlu0 %1494
        %v1496 = vsub.f32 %v1479, %v1489
        %v1497 = vsub.f32 %v1482, %v1492
        %v1498 = vsub.f32 %v1485, %v1495
        %v1499 = vmul.f32 %v1496, 1.442695
        %v1500 = vpow.pop %v1499
        %v1501 = vmul.f32 %v1497, 1.442695
        %v1502 = vpow.pop %v1501
        %v1503 = vmul.f32 %v1498, 1.442695
        %v1504 = vpow.pop %v1503
        %v1505 = vsel %vm1105, %v1500, 0.0
        %1506 = vadd.xlane.f32.xlu0 %v1505
        %v1507 = vpop.xlane.xlu0 %1506
        %v1508 = vsel %vm1105, %v1502, 0.0
        %1509 = vadd.xlane.f32.xlu0 %v1508
        %v1510 = vpop.xlane.xlu0 %1509
        %v1511 = vsel %vm1105, %v1504, 0.0
        %1512 = vadd.xlane.f32.xlu0 %v1511
        %v1513 = vpop.xlane.xlu0 %1512
        %v1514 = vrcp.pop %v1507
        %v1515 = vrcp.pop %v1510
        %v1516 = vrcp.pop %v1513
        %v1517 = vmul.f32 %v1500, %v1514
        %v1518 = vmul.f32 %v1502, %v1515
        %v1519 = vmul.f32 %v1504, %v1516
        %1520 = vrot.lane.b32.xlu0 %v1051, 40
        %v1521 = vpop.permute.xlu0 %1520
        %1522 = vrot.lane.b32.xlu0 %v1052, 40
        %v1523 = vpop.permute.xlu0 %1522
        %1524 = vrot.lane.b32.xlu0 %v1053, 40
        %v1525 = vpop.permute.xlu0 %1524
        %v1530 = vsel %vm1105, %v1517, 0
        %v1533 = vsel %vm1105, %v1518, 0
        %v1536 = vsel %vm1105, %v1519, 0
        %1538 = vmatpush.msra.mxu0 0.0
        %1539 = vmatpush.msra.mxu0 0.0
        %1540 = vmatpush.msra.mxu0 0.0
        %1541 = vmatpush.msra.mxu0 0.0
        %1542 = vmatpush.msra.mxu0 0.0
        %1543 = vmatpush.msra.mxu0 0.0
        %1544 = vmatpush.msra.mxu0 0.0
        %1545 = vmatpush.msra.mxu0 0.0
        %1546 = vmatpush.msra.mxu0 0.0
        %1547 = vmatpush.msra.mxu0 0.0
        %1548 = vmatpush.msra.mxu0 0.0
        %1549 = vmatpush.msra.mxu0 0.0
        %1550 = vmatpush.msra.mxu0 0.0
        %1551 = vmatpush.msra.mxu0 %v1525
        %1552 = vmatpush.msra.mxu0 %v1523
        %1553 = vmatpush.msra.mxu0 %v1521
        %1554 = vmatmul.f32.gmra.mxu0 %v1530
        %v1555 = vpop.f32.mrf.mxu0
        %v1556 = vadd.f32 0.0, %v1555
        %1557 = vmatmul.f32.gmra.mxu0 %v1533
        %v1558 = vpop.f32.mrf.mxu0
        %v1559 = vadd.f32 0.0, %v1558
        %1560 = vmatmul.f32.gmra.mxu0 %v1536
        %v1561 = vpop.f32.mrf.mxu0
        %v1562 = vadd.f32 0.0, %v1561
        %1563 = vdwg.mxu0
        %1567 = vrot.lane.b32.xlu0 %v1302, 8
        %v1568 = vpop.permute.xlu0 %1567
        %1569 = vrot.lane.b32.xlu0 %v1305, 8
        %v1570 = vpop.permute.xlu0 %1569
        %1571 = vrot.lane.b32.xlu0 %v1308, 8
        %v1572 = vpop.permute.xlu0 %1571
        %1579 = vrot.lane.b32.xlu0 %v1429, 16
        %v1580 = vpop.permute.xlu0 %1579
        %1581 = vrot.lane.b32.xlu0 %v1432, 16
        %v1582 = vpop.permute.xlu0 %1581
        %1583 = vrot.lane.b32.xlu0 %v1435, 16
        %v1584 = vpop.permute.xlu0 %1583
        %1591 = vrot.lane.b32.xlu0 %v1556, 24
        %v1592 = vpop.permute.xlu0 %1591
        %1593 = vrot.lane.b32.xlu0 %v1559, 24
        %v1594 = vpop.permute.xlu0 %1593
        %1595 = vrot.lane.b32.xlu0 %v1562, 24
        %v1596 = vpop.permute.xlu0 %1595
        %v1600 = vsel %vm1063, %v1175, %v1568
        %v1601 = vsel %vm1063, %v1178, %v1570
        %v1602 = vsel %vm1063, %v1181, %v1572
        %v1603 = vsel %vm1008, %v1600, %v1580
        %v1604 = vsel %vm1008, %v1601, %v1582
        %v1605 = vsel %vm1008, %v1602, %v1584
        %v1606 = vsel %vm1105, %v1603, %v1592
        %v1607 = vsel %vm1105, %v1604, %v1594
        %v1608 = vsel %vm1105, %v1605, %v1596
        %v1609 = vpack.c.bf16 %v1607, %v1606
        %v1610 = vpack.c.bf16 %v1608, %v1608
        %v1611 = vld [vmem:[%s766] sm:$0xf]
        %v1612 = vld [vmem:[%s766 + $0x4] sm:$0xf]
        %v1613 = vld [vmem:[%s766 + $0x8] sm:$0xf]
        %v1614 = vld [vmem:[%s766 + $0xc] sm:$0xf]
        %v1615 = vld [vmem:[%s769] sm:$0x1]
        %v1617 = vperm.slane %v1615, 0
        %v1623 = vunpack.c.l.b16 %v1611
        %v1624 = vunpack.c.l.b16 %v1612
        %v1625 = vunpack.c.l.b16 %v1613
        %v1626 = vunpack.c.l.b16 %v1614
        %v1627 = vpack.c.b16 %v1624, %v1623
        %v1628 = vpack.c.b16 %v1626, %v1625
        %v1632 = vsel %vm853, %v1609, 0
        %v1635 = vsel %vm853, %v1610, 0
        %1637 = vmatpush.bf16.msra.mxu0 0
        %1638 = vmatpush.bf16.msra.mxu0 0
        %1639 = vmatpush.bf16.msra.mxu0 0
        %1640 = vmatpush.bf16.msra.mxu0 0
        %1641 = vmatpush.bf16.msra.mxu0 0
        %1642 = vmatpush.bf16.msra.mxu0 0
        %1643 = vmatpush.bf16.msra.mxu0 %v1628
        %1644 = vmatpush.bf16.msra.mxu0 %v1627
        %1645 = vmatmul.bf16.gmra.mxu0 %v1632
        %v1646 = vpop.f32.mrf.mxu0
        %v1647 = vadd.f32 %v1617, %v1646
        %v1648 = vpop.f32.mrf.mxu0
        %v1649 = vadd.f32 %v1617, %v1648
        %1650 = vmatmul.bf16.gmra.mxu0 %v1635
        %v1651 = vpop.f32.mrf.mxu0
        %v1652 = vadd.f32 %v1617, %v1651
        %v1653 = vpop.f32.mrf.mxu0
        %1654 = vdwg.mxu0
        %v1655 = vadd.f32 %v824, %v1647
        %v1656 = vadd.f32 %v825, %v1649
        %v1657 = vadd.f32 %v826, %v1652
        %v1658 = vld [vmem:[%s772] sm:$0x1]
        %v1659 = vld [vmem:[%s775] sm:$0x1]
        %v1660 = vsel %vm853, %v1655, 0.0
        %1661 = vadd.xlane.f32.xlu0 %v1660
        %v1662 = vpop.xlane.xlu0 %1661
        %v1663 = vsel %vm853, %v1656, 0.0
        %1664 = vadd.xlane.f32.xlu0 %v1663
        %v1665 = vpop.xlane.xlu0 %1664
        %v1666 = vsel %vm853, %v1657, 0.0
        %1667 = vadd.xlane.f32.xlu0 %v1666
        %v1668 = vpop.xlane.xlu0 %1667
        %v1669 = vmul.f32 %v1662, %v869
        %v1670 = vmul.f32 %v1665, %v869
        %v1671 = vmul.f32 %v1668, %v869
        %v1672 = vsub.f32 %v1655, %v1669
        %v1673 = vsub.f32 %v1656, %v1670
        %v1674 = vsub.f32 %v1657, %v1671
        %v1675 = vmul.f32 %v1672, %v1672
        %v1676 = vmul.f32 %v1673, %v1673
        %v1677 = vmul.f32 %v1674, %v1674
        %v1678 = vsel %vm853, %v1675, 0.0
        %1679 = vadd.xlane.f32.xlu0 %v1678
        %v1680 = vpop.xlane.xlu0 %1679
        %v1681 = vsel %vm853, %v1676, 0.0
        %1682 = vadd.xlane.f32.xlu0 %v1681
        %v1683 = vpop.xlane.xlu0 %1682
        %v1684 = vsel %vm853, %v1677, 0.0
        %1685 = vadd.xlane.f32.xlu0 %v1684
        %v1686 = vpop.xlane.xlu0 %1685
        %v1687 = vmul.f32 %v1680, %v869
        %v1688 = vmul.f32 %v1683, %v869
        %v1689 = vmul.f32 %v1686, %v869
        %v1690 = vadd.f32 %v1687, 1e-06
        %v1691 = vadd.f32 %v1688, 1e-06
        %v1692 = vadd.f32 %v1689, 1e-06
        %v1693 = vrsqrt.pop %v1690
        %v1694 = vmul.f32 %v1693, %v1690
        %v1695 = vmul.f32 %v1694, %v1693
        %v1696 = vmul.f32 0.5, %v1695
        %v1697 = vsub.f32 1.5, %v1696
        %v1698 = vmul.f32 %v1693, %v1697
        %vm1699 = vweird.f32 %v1690
        %vm1700 = vweird.f32 %v1693
        %vm1701 = vmor %vm1699, %vm1700
        %v1702 = vsel %vm1701, %v1693, %v1698
        %v1703 = vrsqrt.pop %v1691
        %v1704 = vmul.f32 %v1703, %v1691
        %v1705 = vmul.f32 %v1704, %v1703
        %v1706 = vmul.f32 0.5, %v1705
        %v1707 = vsub.f32 1.5, %v1706
        %v1708 = vmul.f32 %v1703, %v1707
        %vm1709 = vweird.f32 %v1691
        %vm1710 = vweird.f32 %v1703
        %vm1711 = vmor %vm1709, %vm1710
        %v1712 = vsel %vm1711, %v1703, %v1708
        %v1713 = vrsqrt.pop %v1692
        %v1714 = vmul.f32 %v1713, %v1692
        %v1715 = vmul.f32 %v1714, %v1713
        %v1716 = vmul.f32 0.5, %v1715
        %v1717 = vsub.f32 1.5, %v1716
        %v1718 = vmul.f32 %v1713, %v1717
        %vm1719 = vweird.f32 %v1692
        %vm1720 = vweird.f32 %v1713
        %vm1721 = vmor %vm1719, %vm1720
        %v1722 = vsel %vm1721, %v1713, %v1718
        %v1723 = vmul.f32 %v1672, %v1702
        %v1724 = vmul.f32 %v1673, %v1712
        %v1725 = vmul.f32 %v1674, %v1722
        %v1727 = vperm.slane %v1658, 0
        %v1729 = vmul.f32 %v1723, %v1727
        %v1730 = vmul.f32 %v1724, %v1727
        %v1731 = vmul.f32 %v1725, %v1727
        %v1733 = vperm.slane %v1659, 0
        %v1735 = vadd.f32 %v1729, %v1733
        %v1736 = vadd.f32 %v1730, %v1733
        %v1737 = vadd.f32 %v1731, %v1733
        %v1738 = vpack.c.bf16 %v1736, %v1735
        %v1739 = vpack.c.bf16 %v1737, %v1737
        %v1740 = vld [vmem:[%s780] sm:$0xf]
        %v1741 = vld [vmem:[%s780 + $0x4] sm:$0xf]
        %v1742 = vld [vmem:[%s780 + $0x8] sm:$0xf]
        %v1743 = vld [vmem:[%s780 + $0xc] sm:$0xf]
        %v1744 = vld [vmem:[%s783] sm:$0x1]
        %v1746 = vperm.slane %v1744, 0
        %v1752 = vunpack.c.l.b16 %v1740
        %v1753 = vunpack.c.l.b16 %v1741
        %v1754 = vunpack.c.l.b16 %v1742
        %v1755 = vunpack.c.l.b16 %v1743
        %v1756 = vpack.c.b16 %v1753, %v1752
        %v1757 = vpack.c.b16 %v1755, %v1754
        %v1761 = vsel %vm853, %v1738, 0
        %v1764 = vsel %vm853, %v1739, 0
        %1766 = vmatpush.bf16.msra.mxu0 0
        %1767 = vmatpush.bf16.msra.mxu0 0
        %1768 = vmatpush.bf16.msra.mxu0 0
        %1769 = vmatpush.bf16.msra.mxu0 0
        %1770 = vmatpush.bf16.msra.mxu0 0
        %1771 = vmatpush.bf16.msra.mxu0 0
        %1772 = vmatpush.bf16.msra.mxu0 %v1757
        %1773 = vmatpush.bf16.msra.mxu0 %v1756
        %1774 = vmatmul.bf16.gmra.mxu0 %v1761
        %v1775 = vpop.f32.mrf.mxu0
        %v1776 = vadd.f32 %v1746, %v1775
        %v1777 = vpop.f32.mrf.mxu0
        %v1778 = vadd.f32 %v1746, %v1777
        %1779 = vmatmul.bf16.gmra.mxu0 %v1764
        %v1780 = vpop.f32.mrf.mxu0
        %v1781 = vadd.f32 %v1746, %v1780
        %v1782 = vpop.f32.mrf.mxu0
        %1783 = vdwg.mxu0
        %v1784 = vmul.f32 %v1776, 0.70710677
        %v1785 = vmul.f32 %v1778, 0.70710677
        %v1786 = vmul.f32 %v1781, 0.70710677
        %v1787 = vand.u32 2147483647, %v1784
        %v1788 = vand.u32 2147483647, %v1785
        %v1789 = vand.u32 2147483647, %v1786
        %v1790 = vmul.f32 %v1787, 0.3275911
        %v1791 = vmul.f32 %v1788, 0.3275911
        %v1792 = vmul.f32 %v1789, 0.3275911
        %v1793 = vadd.f32 %v1790, 1.0
        %v1794 = vadd.f32 %v1791, 1.0
        %v1795 = vadd.f32 %v1792, 1.0
        %v1796 = vrcp.pop %v1793
        %v1797 = vmul.f32 %v1793, %v1796
        %v1798 = vsub.f32 1.0, %v1797
        %v1799 = vmul.f32 %v1796, %v1798
        %v1800 = vadd.f32 %v1796, %v1799
        %vm1801 = vweird.f32 %v1793
        %vm1802 = vweird.f32 %v1796
        %vm1803 = vmor %vm1801, %vm1802
        %v1804 = vsel %vm1803, %v1796, %v1800
        %v1805 = vand.u32 2147483647, %v1793
        %vm1806 = vcmp.eq.f32.partialorder %v1805, 8.507059e+37
        %v1807 = vand.u32 %v1793, 2147483648
        %v1808 = vor.u32 1.1754944e-38, %v1807
        %v1809 = vsel %vm1806, %v1808, %v1804
        %v1810 = vmul.f32 1.0, %v1809
        %v1811 = vrcp.pop %v1794
        %v1812 = vmul.f32 %v1794, %v1811
        %v1813 = vsub.f32 1.0, %v1812
        %v1814 = vmul.f32 %v1811, %v1813
        %v1815 = vadd.f32 %v1811, %v1814
        %vm1816 = vweird.f32 %v1794
        %vm1817 = vweird.f32 %v1811
        %vm1818 = vmor %vm1816, %vm1817
        %v1819 = vsel %vm1818, %v1811, %v1815
        %v1820 = vand.u32 2147483647, %v1794
        %vm1821 = vcmp.eq.f32.partialorder %v1820, 8.507059e+37
        %v1822 = vand.u32 %v1794, 2147483648
        %v1823 = vor.u32 1.1754944e-38, %v1822
        %v1824 = vsel %vm1821, %v1823, %v1819
        %v1825 = vmul.f32 1.0, %v1824
        %v1826 = vrcp.pop %v1795
        %v1827 = vmul.f32 %v1795, %v1826
        %v1828 = vsub.f32 1.0, %v1827
        %v1829 = vmul.f32 %v1826, %v1828
        %v1830 = vadd.f32 %v1826, %v1829
        %vm1831 = vweird.f32 %v1795
        %vm1832 = vweird.f32 %v1826
        %vm1833 = vmor %vm1831, %vm1832
        %v1834 = vsel %vm1833, %v1826, %v1830
        %v1835 = vand.u32 2147483647, %v1795
        %vm1836 = vcmp.eq.f32.partialorder %v1835, 8.507059e+37
        %v1837 = vand.u32 %v1795, 2147483648
        %v1838 = vor.u32 1.1754944e-38, %v1837
        %v1839 = vsel %vm1836, %v1838, %v1834
        %v1840 = vmul.f32 1.0, %v1839
        %v1841 = vmul.f32 %v1810, 1.0614054
        %v1842 = vmul.f32 %v1825, 1.0614054
        %v1843 = vmul.f32 %v1840, 1.0614054
        %v1844 = vadd.f32 %v1841, -1.4531521
        %v1845 = vadd.f32 %v1842, -1.4531521
        %v1846 = vadd.f32 %v1843, -1.4531521
        %v1847 = vmul.f32 %v1810, %v1844
        %v1848 = vmul.f32 %v1825, %v1845
        %v1849 = vmul.f32 %v1840, %v1846
        %v1850 = vadd.f32 %v1847, 1.4214138
        %v1851 = vadd.f32 %v1848, 1.4214138
        %v1852 = vadd.f32 %v1849, 1.4214138
        %v1853 = vmul.f32 %v1810, %v1850
        %v1854 = vmul.f32 %v1825, %v1851
        %v1855 = vmul.f32 %v1840, %v1852
        %v1856 = vadd.f32 %v1853, -0.28449672
        %v1857 = vadd.f32 %v1854, -0.28449672
        %v1858 = vadd.f32 %v1855, -0.28449672
        %v1859 = vmul.f32 %v1810, %v1856
        %v1860 = vmul.f32 %v1825, %v1857
        %v1861 = vmul.f32 %v1840, %v1858
        %v1862 = vadd.f32 %v1859, 0.2548296
        %v1863 = vadd.f32 %v1860, 0.2548296
        %v1864 = vadd.f32 %v1861, 0.2548296
        %v1865 = vmul.f32 %v1810, %v1862
        %v1866 = vmul.f32 %v1825, %v1863
        %v1867 = vmul.f32 %v1840, %v1864
        %v1868 = vsub.f32 0.0, %v1787
        %v1869 = vsub.f32 0.0, %v1788
        %v1870 = vsub.f32 0.0, %v1789
        %v1871 = vmul.f32 %v1868, %v1787
        %v1872 = vmul.f32 %v1869, %v1788
        %v1873 = vmul.f32 %v1870, %v1789
        %v1874 = vmul.f32 %v1871, 1.442695
        %v1875 = vpow.pop %v1874
        %v1876 = vmul.f32 %v1872, 1.442695
        %v1877 = vpow.pop %v1876
        %v1878 = vmul.f32 %v1873, 1.442695
        %v1879 = vpow.pop %v1878
        %v1880 = vmul.f32 %v1865, %v1875
        %v1881 = vmul.f32 %v1866, %v1877
        %v1882 = vmul.f32 %v1867, %v1879
        %v1883 = vsub.f32 1.0, %v1880
        %v1884 = vsub.f32 1.0, %v1881
        %v1885 = vsub.f32 1.0, %v1882
        %vm1886 = vcmp.ge.f32.partialorder %v1784, 0.0
        %vm1887 = vcmp.ge.f32.partialorder %v1785, 0.0
        %vm1888 = vcmp.ge.f32.partialorder %v1786, 0.0
        %v1889 = vsub.f32 0.0, %v1883
        %v1890 = vsub.f32 0.0, %v1884
        %v1891 = vsub.f32 0.0, %v1885
        %v1892 = vsel %vm1886, %v1883, %v1889
        %v1893 = vsel %vm1887, %v1884, %v1890
        %v1894 = vsel %vm1888, %v1885, %v1891
        %v1895 = vmul.f32 %v1776, 0.5
        %v1896 = vmul.f32 %v1778, 0.5
        %v1897 = vmul.f32 %v1781, 0.5
        %v1898 = vadd.f32 %v1892, 1.0
        %v1899 = vadd.f32 %v1893, 1.0
        %v1900 = vadd.f32 %v1894, 1.0
        %v1901 = vmul.f32 %v1895, %v1898
        %v1902 = vmul.f32 %v1896, %v1899
        %v1903 = vmul.f32 %v1897, %v1900
        %v1904 = vpack.c.bf16 %v1902, %v1901
        %v1905 = vpack.c.bf16 %v1903, %v1903
        %v1906 = vld [vmem:[%s788] sm:$0xf]
        %v1907 = vld [vmem:[%s788 + $0x4] sm:$0xf]
        %v1908 = vld [vmem:[%s788 + $0x8] sm:$0xf]
        %v1909 = vld [vmem:[%s788 + $0xc] sm:$0xf]
        %v1910 = vld [vmem:[%s788 + $0x10] sm:$0xf]
        %v1911 = vld [vmem:[%s788 + $0x14] sm:$0xf]
        %v1912 = vld [vmem:[%s788 + $0x18] sm:$0xf]
        %v1913 = vld [vmem:[%s788 + $0x1c] sm:$0xf]
        %v1914 = vld [vmem:[%s788 + $0x20] sm:$0xf]
        %v1915 = vld [vmem:[%s788 + $0x24] sm:$0xf]
        %v1916 = vld [vmem:[%s788 + $0x28] sm:$0xf]
        %v1917 = vld [vmem:[%s788 + $0x2c] sm:$0xf]
        %v1918 = vld [vmem:[%s788 + $0x30] sm:$0xf]
        %v1919 = vld [vmem:[%s788 + $0x34] sm:$0xf]
        %v1920 = vld [vmem:[%s788 + $0x38] sm:$0xf]
        %v1921 = vld [vmem:[%s788 + $0x3c] sm:$0xf]
        %v1922 = vld [vmem:[%s791] sm:$0x1]
        %v1924 = vperm.slane %v1922, 0
        %v1942 = vunpack.c.l.b16 %v1906
        %v1943 = vunpack.c.l.b16 %v1907
        %v1944 = vunpack.c.l.b16 %v1908
        %v1945 = vunpack.c.l.b16 %v1909
        %v1946 = vunpack.c.l.b16 %v1910
        %v1947 = vunpack.c.l.b16 %v1911
        %v1948 = vunpack.c.l.b16 %v1912
        %v1949 = vunpack.c.l.b16 %v1913
        %v1950 = vunpack.c.l.b16 %v1914
        %v1951 = vunpack.c.l.b16 %v1915
        %v1952 = vunpack.c.l.b16 %v1916
        %v1953 = vunpack.c.l.b16 %v1917
        %v1954 = vunpack.c.l.b16 %v1918
        %v1955 = vunpack.c.l.b16 %v1919
        %v1956 = vunpack.c.l.b16 %v1920
        %v1957 = vunpack.c.l.b16 %v1921
        %v1958 = vpack.c.b16 %v1943, %v1942
        %v1959 = vpack.c.b16 %v1945, %v1944
        %v1960 = vpack.c.b16 %v1947, %v1946
        %v1961 = vpack.c.b16 %v1949, %v1948
        %v1962 = vpack.c.b16 %v1951, %v1950
        %v1963 = vpack.c.b16 %v1953, %v1952
        %v1964 = vpack.c.b16 %v1955, %v1954
        %v1965 = vpack.c.b16 %v1957, %v1956
        %1974 = vmatpush.bf16.msra.mxu0 %v1965
        %1975 = vmatpush.bf16.msra.mxu0 %v1964
        %1976 = vmatpush.bf16.msra.mxu0 %v1963
        %1977 = vmatpush.bf16.msra.mxu0 %v1962
        %1978 = vmatpush.bf16.msra.mxu0 %v1961
        %1979 = vmatpush.bf16.msra.mxu0 %v1960
        %1980 = vmatpush.bf16.msra.mxu0 %v1959
        %1981 = vmatpush.bf16.msra.mxu0 %v1958
        %1982 = vmatmul.bf16.gmra.mxu0 %v1904
        %v1983 = vpop.f32.mrf.mxu0
        %v1984 = vadd.f32 %v1924, %v1983
        %v1985 = vpop.f32.mrf.mxu0
        %v1986 = vadd.f32 %v1924, %v1985
        %1987 = vmatmul.bf16.gmra.mxu0 %v1905
        %v1988 = vpop.f32.mrf.mxu0
        %v1989 = vadd.f32 %v1924, %v1988
        %v1990 = vpop.f32.mrf.mxu0
        %1991 = vdwg.mxu0
        %v1992 = vadd.f32 %v1655, %v1984
        %v1993 = vadd.f32 %v1656, %v1986
        %v1994 = vadd.f32 %v1657, %v1989
        %1995 = vst.msk [vmem:[#allocation2] sm:$0xff] %vm853, %v1992
        %1996 = vst.msk [vmem:[#allocation2 + $0x8] sm:$0xff] %vm853, %v1993
        %1997 = vst.msk [vmem:[#allocation2 + $0x10] sm:$0xff] %vm853, %v1994
        %p1998 = scmp.eq.s32.totalorder %s38, 1
        // Predicated region
        $region116: #{prefix_forward.1} parent=91 // pred_check
          %p1999 = pneg %p1998
        $region117: #{prefix_forward.1} parent=91 // pred_check_branch
          %2001 = sbr.rel (%p1999) target = $region119
        $region118: #{prefix_forward.1} parent=91 // pred_region
          %v2002 = vld [vmem:[%s15] sm:$0x1]
          %v2003 = vld [vmem:[%s16] sm:$0x1]
          %vm2004 = vcmask 253952
          %v2005 = vsel %vm2004, %v1992, 0.0
          %2006 = vadd.xlane.f32.xlu0 %v2005
          %v2007 = vpop.xlane.xlu0 %2006
          %v2008 = vmul.f32 %v2007, %v869
          %v2009 = vsub.f32 %v1992, %v2008
          %v2010 = vmul.f32 %v2009, %v2009
          %v2011 = vsel %vm2004, %v2010, 0.0
          %2012 = vadd.xlane.f32.xlu0 %v2011
          %v2013 = vpop.xlane.xlu0 %2012
          %v2014 = vmul.f32 %v2013, %v869
          %v2015 = vadd.f32 %v2014, 1e-06
          %v2016 = vrsqrt.pop %v2015
          %v2017 = vmul.f32 %v2016, %v2015
          %v2018 = vmul.f32 %v2017, %v2016
          %v2019 = vmul.f32 0.5, %v2018
          %v2020 = vsub.f32 1.5, %v2019
          %v2021 = vmul.f32 %v2016, %v2020
          %vm2022 = vweird.f32 %v2015
          %vm2023 = vweird.f32 %v2016
          %vm2024 = vmor %vm2022, %vm2023
          %v2025 = vsel %vm2024, %v2016, %v2021
          %v2026 = vmul.f32 %v2009, %v2025
          %v2027 = vmul.f32 %v2026, %v2002
          %v2028 = vadd.f32 %v2027, %v2003
          %v2029 = vld [vmem:[%s17] sm:$0xff]
          %v2030 = vld [vmem:[%s17 + $0x8] sm:$0xff]
          %v2031 = vld [vmem:[%s17 + $0x10] sm:$0xff]
          %v2032 = vld [vmem:[%s17 + $0x18] sm:$0xff]
          %v2033 = vld [vmem:[%s18] sm:$0x1]
          %v2035 = vsel %vm853, %v2028, 0
          %2037 = vmatpush.msra.mxu0 0.0
          %2038 = vmatpush.msra.mxu0 0.0
          %2039 = vmatpush.msra.mxu0 0.0
          %2040 = vmatpush.msra.mxu0 0.0
          %2041 = vmatpush.msra.mxu0 0.0
          %2042 = vmatpush.msra.mxu0 0.0
          %2043 = vmatpush.msra.mxu0 0.0
          %2044 = vmatpush.msra.mxu0 0.0
          %2045 = vmatpush.msra.mxu0 0.0
          %2046 = vmatpush.msra.mxu0 0.0
          %2047 = vmatpush.msra.mxu0 0.0
          %2048 = vmatpush.msra.mxu0 0.0
          %2049 = vmatpush.msra.mxu0 %v2032
          %2050 = vmatpush.msra.mxu0 %v2031
          %2051 = vmatpush.msra.mxu0 %v2030
          %2052 = vmatpush.msra.mxu0 %v2029
          %2053 = vmatmul.f32.gmra.mxu0 %v2035
          %v2054 = vpop.f32.mrf.mxu0
          %v2055 = vadd.f32 %v2033, %v2054
          %2056 = vdwg.mxu0
          %2057 = vst [vmem:[%s739] sm:$0x1] %v2055
        $region119: #{prefix_forward.1} parent=91 // pred_fallthru
          _
        %s2058 = sand.u32 %s501, 1
        %s2059 = scalar_lea.sflag [#allocation5], %s2058
        %s2060 = sand.u32 %s501, 1
        %s2061 = scalar_lea.vmem [#allocation4], %s2060
        // Predicated region
        $region120: #{prefix_forward.1} parent=91 // pred_check
          %p2062 = pneg %p511
        $region121: #{prefix_forward.1} parent=91 // pred_check_branch
          %2064 = sbr.rel (%p2062) target = $region123
        $region122: #{prefix_forward.1} parent=91 // pred_region
          %2066 = vsyncadd %s2059, 0
          %s2067 = scalar_lea.hbm %s19, %s37
          %s2069 = sshll.u32 %s2061, 4
          %s2070 = int_to_ptr.vmem [resolvable:$true] %s2069
          %s2071 = sshll.u32 %s2067, 4
          %s2072 = int_to_ptr.hbm [resolvable:$true] %s2071
          %2074 = dma.vmem_to_hbm [thread:$0]  %s2070, 16, %s2072, %s2059
        $region123: #{prefix_forward.1} parent=91 // pred_fallthru
          _
      $region92: #{prefix_forward.1} parent=5 // pred_fallthru
        _
      %p2075 = scmp.le.s32.totalorder 2, %s28
      // Predicated region
      $region124: #{prefix_forward.1} parent=5 // pred_check
        %p2076 = pneg %p2075
      $region125: #{prefix_forward.1} parent=5 // pred_check_branch
        %2078 = sbr.rel (%p2076) target = $region127
      $region126: #{prefix_forward.1} parent=5 // pred_region
        %s2079 = ssub.s32 %s28, 2
        // Predicated region
        $region128: #{prefix_forward.1} parent=126 // pred_check
          %p2080 = pneg %p517
        $region129: #{prefix_forward.1} parent=126 // pred_check_branch
          %2082 = sbr.rel (%p2080) target = $region131
        $region130: #{prefix_forward.1} parent=126 // pred_region
          %s2083 = sand.u32 %s502, 1
          %s2084 = scalar_lea.sflag [#allocation5], %s2083
          %s2085 = sand.u32 %s502, 1
          %s2086 = scalar_lea.vmem [#allocation4], %s2085
          %2088 = dma.done %s2084, 16
        $region131: #{prefix_forward.1} parent=126 // pred_fallthru
          _
      $region127: #{prefix_forward.1} parent=5 // pred_fallthru
        _
    $region6: #{prefix_forward.1} parent=1 // loop_footer
      %s32 = sadd.s32 1, %s28
    $region7: #{prefix_forward.1} parent=1 // loop_footer_branch
      %27 = sbr.rel target = $region3
    $region8: #{prefix_forward.1} parent=1 // loop_exit
      _
    %2089 = vsyncpa [#allocation5], 1
    %s2090 = scalar_lea.sflag [#allocation5], 1
    %2091 = vsyncpa %s2090, 1
  %2092 = vsyncmov [#allocation3]
  %s2093 = vpop.sfrf %2092
  %p2094 = scmp.eq.s32.totalorder %s2093, 0
  %p2095 = pneg %p2094
  %2097 = shalt.err (%p2095)

</llo_original>
